<compile_context>
chip_gen: v5e
topology: v5e:2x2
jax: 0.10.0
libtpu: 0.0.40
codegen_flags: <defaults>
</compile_context>

<pallas_src>
import functools

import jax
import jax.numpy as jnp
import numpy as np
from jax.experimental import pallas as pl
from jax.experimental.pallas import tpu as pltpu


def _shift_lanes(x, s):
    """result[..., p] = x[..., p + s], zero-filled outside [0, N)."""
    n = x.shape[-1]
    if s == 0:
        return x
    a = abs(s)
    if a >= n:
        return jnp.zeros_like(x)
    z = jnp.zeros(x.shape[:-1] + (a,), x.dtype)
    if s > 0:
        return jnp.concatenate([x[..., s:], z], axis=-1)
    return jnp.concatenate([z, x[..., :n - a]], axis=-1)


def sva_body_kernel(xf_ref, xr_ref, xl_ref, xrt_ref,
                    w1t_ref, w2_ref, wsa_ref, wf_ref,
                    of_ref, or_ref, ol_ref, ort_ref, *, width):
    f32 = jnp.float32
    C, HW = xf_ref.shape
    Wd = width
    H = HW // Wd

    in_refs = (xf_ref, xr_ref, xl_ref, xrt_ref)
    out_refs = (of_ref, or_ref, ol_ref, ort_ref)
    xs = [r[...].astype(f32) for r in in_refs]                      # 4 x (C, HW)

    # ---------------- MVAChannelAttention ----------------
    avg_vec = jnp.concatenate(
        [jnp.mean(x, axis=1, keepdims=True) for x in xs], axis=0)   # (4C, 1)
    max_vec = jnp.concatenate(
        [jnp.max(x, axis=1, keepdims=True) for x in xs], axis=0)    # (4C, 1)

    w1t = w1t_ref[...]                                              # (4C, hidden)
    w2 = w2_ref[...]                                                # (4C, hidden)

    # hidden = planes//16 (== 1 here) -> keep the tiny MLP on the VPU (the MXU
    # would be essentially all padding at this size).
    def mlp(v):                                                     # (4C,1) -> (4C,1)
        h = jnp.maximum(jnp.sum(w1t * v, axis=0, keepdims=True), 0.0)   # (1, hidden)
        return jnp.sum(w2 * h, axis=1, keepdims=True)                   # (4C, 1)

    gate = jax.nn.sigmoid(mlp(avg_vec) + mlp(max_vec))              # (4C, 1)
    gates = [gate[k * C:(k + 1) * C, :] for k in range(4)]          # 4 x (C, 1)

    # ---------------- MVASpatialAttention ----------------
    # Channel mean/max of the gated views (gated copies are transient; the
    # gate is re-applied to the raw view only at the final store).
    amaps, mmaps = [], []
    for k in range(4):
        gx = xs[k] * gates[k]                                       # (C, HW)
        amaps.append(jnp.mean(gx, axis=0, keepdims=True))           # (1, HW)
        mmaps.append(jnp.max(gx, axis=0, keepdims=True))            # (1, HW)
    # Stacked block: rows 0..3 = avg maps of the 4 views, rows 4..7 = max maps.
    S = jnp.concatenate(amaps + mmaps, axis=0)                      # (8, HW)

    # Constant column-validity masks for lane shifts (splats + concats only).
    def col_mask(dj):
        a = abs(dj)
        if a == 0:
            return None
        ones = jnp.ones((1, Wd - a), f32)
        zeros = jnp.zeros((1, a), f32)
        row = jnp.concatenate([ones, zeros] if dj > 0 else [zeros, ones], axis=1)
        return jnp.concatenate([row] * H, axis=1)                   # (1, HW)

    masks = {dj: col_mask(dj) for dj in range(-3, 4)}

    # 7x7 conv (conv_front, applied to all four views as in the original
    # module) on the stacked (8, HW) block: 7 dj lane-shifts of S, a per-(i,j)
    # per-sublane weight column from the (8, 49) VMEM table, then 7 di row
    # shifts of the per-di accumulators; avg/max halves folded at the end.
    wsa = wsa_ref[...]                                              # (8, 49)
    inner = [None] * 7
    for j in range(7):
        dj = j - 3
        s_s = _shift_lanes(S, dj)
        if masks[dj] is not None:
            s_s = s_s * masks[dj]
        for i in range(7):
            idx = i * 7 + j
            c = s_s * wsa[:, idx:idx + 1]                           # (8,HW)*(8,1)
            inner[i] = c if inner[i] is None else inner[i] + c
    conv8 = None
    for i in range(7):
        di = i - 3
        t = _shift_lanes(inner[i], di * Wd)
        conv8 = t if conv8 is None else conv8 + t                   # (8, HW)
    sa = jax.nn.sigmoid(conv8[0:4, :] + conv8[4:8, :])              # (4, HW)

    # 3x3 fusion conv over the four maps concatenated along H.  Build the
    # "global row +1" / "global row -1" maps once (view-boundary aware: views
    # bleed into each other across the concatenation, as in the original).
    zrow = jnp.zeros((1, HW), f32)
    nxt = jnp.concatenate([sa[1:, :], zrow], axis=0)                # view k+1 (zero past last)
    prv = jnp.concatenate([zrow, sa[:-1, :]], axis=0)               # view k-1 (zero before first)
    row_p1 = _shift_lanes(sa, Wd) + _shift_lanes(nxt, Wd - HW)      # global row h+1
    row_m1 = _shift_lanes(sa, -Wd) + _shift_lanes(prv, HW - Wd)     # global row h-1

    fused = None
    for j in range(3):
        dj = j - 1
        comp = (_shift_lanes(row_m1, dj) * wf_ref[0 * 3 + j]
                + _shift_lanes(sa, dj) * wf_ref[1 * 3 + j]
                + _shift_lanes(row_p1, dj) * wf_ref[2 * 3 + j])
        if masks[dj] is not None:
            comp = comp * masks[dj]
        fused = comp if fused is None else fused + comp             # (4, HW)

    # TaylorSoftmax over the concatenated-H axis (n=4), Horner form.
    x = fused
    fn = 1.0 + x * (1.0 + x * (0.5 + x * ((1.0 / 6.0) + x * (1.0 / 24.0))))
    colsum = jnp.sum(fn, axis=0, keepdims=True)                     # (1, HW): sum over views
    if H & (H - 1) == 0:
        # Cyclic butterfly over the H row-blocks: after log2(H) roll+add steps
        # every lane holds the full per-column denominator.
        den = colsum
        sblk = H // 2
        while sblk >= 1:
            den = den + pltpu.roll(den, shift=sblk * Wd, axis=1)
            sblk //= 2
        invb = pl.reciprocal(den, approx=False)                     # (1, HW)
    else:
        d = colsum[:, 0:Wd]
        for h in range(1, H):
            d = d + colsum[:, h * Wd:(h + 1) * Wd]                  # (1, Wd)
        inv = pl.reciprocal(d, approx=False)
        invb = jnp.concatenate([inv] * H, axis=1)                   # (1, HW)
    att = fn * invb                                                 # (4, HW)

    # -------- apply (channel gate) x (spatial attention) to the raw views ----
    for k in range(4):
        scale = gates[k] * att[k:k + 1, :]                          # (C,1)*(1,HW) -> (C,HW)
        out_refs[k][...] = (xs[k] * scale).astype(out_refs[k].dtype)


def sva_body(front, rear, left, right, w1, w2, w_sa, w_fuse):
    B, C, H, Wd = front.shape
    HW = H * Wd
    hidden = w1.shape[0]

    # Free reshapes (row-major): lane-dense big tensors, last dim H*W (= 256,
    # a multiple of 128).  Views are kept as four contiguous slabs (a wrapper
    # concat would cost an extra full HBM copy).
    views = [v.reshape(B, C, HW).astype(jnp.float32)
             for v in (front, rear, left, right)]
    w1t = jnp.transpose(w1).astype(jnp.float32)                 # (4C, hidden)
    w2f = w2.astype(jnp.float32)                                # (4C, hidden)
    # Per-sublane weight columns for the stacked 7x7 conv:
    # rows 0..3 = w_sa[0] (avg path), rows 4..7 = w_sa[1] (max path).
    wsa_col = jnp.repeat(w_sa.reshape(2, 49).astype(jnp.float32), 4, axis=0)  # (8, 49)
    wf_flat = w_fuse.reshape(-1).astype(jnp.float32)            # (9,) -> SMEM scalars

    view_spec = pl.BlockSpec((None, C, HW), lambda b: (b, 0, 0))
    w_spec = pl.BlockSpec((4 * C, hidden), lambda b: (0, 0))
    wsa_spec = pl.BlockSpec((8, 2 * 7 * 7 // 2), lambda b: (0, 0))  # (8, 49) full extent
    smem_spec = pl.BlockSpec(memory_space=pltpu.MemorySpace.SMEM)

    out_shape = tuple(jax.ShapeDtypeStruct((B, C, HW), jnp.float32)
                      for _ in range(4))

    outs = pl.pallas_call(
        functools.partial(sva_body_kernel, width=Wd),
        out_shape=out_shape,
        grid=(B,),
        in_specs=[view_spec, view_spec, view_spec, view_spec,
                  w_spec, w_spec, wsa_spec, smem_spec],
        out_specs=tuple(view_spec for _ in range(4)),
        compiler_params=pltpu.CompilerParams(
            dimension_semantics=("parallel",),
            vmem_limit_bytes=32 * 1024 * 1024),
    )(*views, w1t, w2f, wsa_col, wf_flat)

    return tuple(o.reshape(B, C, H, Wd) for o in outs)


# ---------------- pure-JAX reference (for correctness check) ----------------
def reference(front, rear, left, right, w1, w2, w_sa, w_fuse):
    views = [front, rear, left, right]
    avg = jnp.concatenate([v.mean(axis=(2, 3)) for v in views], axis=1)
    mx = jnp.concatenate([v.max(axis=(2, 3)) for v in views], axis=1)

    def mlp(x):
        h = jnp.maximum(x @ w1.T, 0.0)
        return h @ w2.T

    gate = jax.nn.sigmoid(mlp(avg) + mlp(mx))
    gates = jnp.split(gate, 4, axis=1)
    ca_outs = [v * g[:, :, None, None] for v, g in zip(views, gates)]

    wsa4 = w_sa[None]                           # (1, 2, 7, 7)

    def sa_branch(x):
        a = x.mean(axis=1, keepdims=True)
        m = x.max(axis=1, keepdims=True)
        inp = jnp.concatenate([a, m], axis=1)
        y = jax.lax.conv_general_dilated(inp, wsa4, (1, 1), [(3, 3), (3, 3)],
                                         dimension_numbers=('NCHW', 'OIHW', 'NCHW'))
        return jax.nn.sigmoid(y)

    sa = [sa_branch(c) for c in ca_outs]
    x = jnp.concatenate(sa, axis=2)             # (B, 1, 4H, W)
    wf4 = w_fuse[None, None]                    # (1, 1, 3, 3)
    x = jax.lax.conv_general_dilated(x, wf4, (1, 1), [(1, 1), (1, 1)],
                                     dimension_numbers=('NCHW', 'OIHW', 'NCHW'))
    x = x[:, 0]                                 # (B, 4H, W)
    fn = 1.0 + x + x ** 2 / 2.0 + x ** 3 / 6.0 + x ** 4 / 24.0
    x = fn / fn.sum(axis=1, keepdims=True)
    parts = jnp.split(x, 4, axis=1)
    return [c * p[:, None, :, :] for c, p in zip(ca_outs, parts)]


if __name__ == "__main__":
    key = jax.random.PRNGKey(0)
    # in_channels = 4 per view -> planes = 16, hidden = planes // 16 = 1
    B, C, H, W = 2, 4, 16, 16
    planes = 4 * C
    hidden = planes // 16

    ks = jax.random.split(key, 8)
    front = jax.random.normal(ks[0], (B, C, H, W), jnp.float32)
    rear = jax.random.normal(ks[1], (B, C, H, W), jnp.float32)
    left = jax.random.normal(ks[2], (B, C, H, W), jnp.float32)
    right = jax.random.normal(ks[3], (B, C, H, W), jnp.float32)

    # deterministic synthetic parameters (same shapes as the nn.Module weights)
    w1 = jax.random.normal(ks[4], (hidden, planes), jnp.float32) * 0.2   # fc1 (1x1)
    w2 = jax.random.normal(ks[5], (planes, hidden), jnp.float32) * 0.2   # fc2 (1x1)
    w_sa = jax.random.normal(ks[6], (2, 7, 7), jnp.float32) * 0.1        # conv_front
    w_fuse = jax.random.normal(ks[7], (3, 3), jnp.float32) * 0.1         # conv_fusion

    outs = sva_body(front, rear, left, right, w1, w2, w_sa, w_fuse)
    outs = jax.block_until_ready(outs)

    refs = reference(front, rear, left, right, w1, w2, w_sa, w_fuse)
    for o, r in zip(outs, refs):
        np.testing.assert_allclose(np.asarray(o), np.asarray(r),
                                   rtol=1e-3, atol=1e-5)

    print("KERNEL_OK")
</pallas_src>

<mosaic_0001>
module attributes {stable_mosaic.version = 11 : i64} {
  func.func @sva_body_kernel(%arg0: i32, %arg1: memref<1x4x256xf32, #tpu.memory_space<vmem>>, %arg2: memref<1x4x256xf32, #tpu.memory_space<vmem>>, %arg3: memref<1x4x256xf32, #tpu.memory_space<vmem>>, %arg4: memref<1x4x256xf32, #tpu.memory_space<vmem>>, %arg5: memref<16x1xf32, #tpu.memory_space<vmem>>, %arg6: memref<16x1xf32, #tpu.memory_space<vmem>>, %arg7: memref<8x49xf32, #tpu.memory_space<vmem>>, %arg8: memref<9xf32, #tpu.memory_space<smem>>, %arg9: memref<1x4x256xf32, #tpu.memory_space<vmem>>, %arg10: memref<1x4x256xf32, #tpu.memory_space<vmem>>, %arg11: memref<1x4x256xf32, #tpu.memory_space<vmem>>, %arg12: memref<1x4x256xf32, #tpu.memory_space<vmem>>) attributes {dimension_semantics = [#tpu.dimension_semantics<parallel>], iteration_bounds = array<i64: 2>, scalar_prefetch = 0 : i64, scratch_operands = 0 : i64, tpu.core_type = #tpu.core_type<tc>, window_params = [{transform_indices = @transform_0, window_bounds = array<i64: 1, 4, 256>}, {transform_indices = @transform_1, window_bounds = array<i64: 1, 4, 256>}, {transform_indices = @transform_2, window_bounds = array<i64: 1, 4, 256>}, {transform_indices = @transform_3, window_bounds = array<i64: 1, 4, 256>}, {pipeline_mode = #tpu.pipeline_mode<synchronous>, transform_indices = @transform_4, window_bounds = array<i64: 16, 1>}, {pipeline_mode = #tpu.pipeline_mode<synchronous>, transform_indices = @transform_5, window_bounds = array<i64: 16, 1>}, {pipeline_mode = #tpu.pipeline_mode<synchronous>, transform_indices = @transform_6, window_bounds = array<i64: 8, 49>}, {transform_indices = @transform_7, window_bounds = array<i64: 9>}, {transform_indices = @transform_8, window_bounds = array<i64: 1, 4, 256>}, {transform_indices = @transform_9, window_bounds = array<i64: 1, 4, 256>}, {transform_indices = @transform_10, window_bounds = array<i64: 1, 4, 256>}, {transform_indices = @transform_11, window_bounds = array<i64: 1, 4, 256>}]} {
    %c0 = arith.constant 0 : index
    %c0_0 = arith.constant 0 : index
    %c0_1 = arith.constant 0 : index
    %0 = vector.load %arg1[%c0, %c0_0, %c0_1] : memref<1x4x256xf32, #tpu.memory_space<vmem>>, vector<1x4x256xf32>
    %1 = vector.shape_cast %0 : vector<1x4x256xf32> to vector<4x256xf32>
    %c0_2 = arith.constant 0 : index
    %c0_3 = arith.constant 0 : index
    %c0_4 = arith.constant 0 : index
    %2 = vector.load %arg2[%c0_2, %c0_3, %c0_4] : memref<1x4x256xf32, #tpu.memory_space<vmem>>, vector<1x4x256xf32>
    %3 = vector.shape_cast %2 : vector<1x4x256xf32> to vector<4x256xf32>
    %c0_5 = arith.constant 0 : index
    %c0_6 = arith.constant 0 : index
    %c0_7 = arith.constant 0 : index
    %4 = vector.load %arg3[%c0_5, %c0_6, %c0_7] : memref<1x4x256xf32, #tpu.memory_space<vmem>>, vector<1x4x256xf32>
    %5 = vector.shape_cast %4 : vector<1x4x256xf32> to vector<4x256xf32>
    %c0_8 = arith.constant 0 : index
    %c0_9 = arith.constant 0 : index
    %c0_10 = arith.constant 0 : index
    %6 = vector.load %arg4[%c0_8, %c0_9, %c0_10] : memref<1x4x256xf32, #tpu.memory_space<vmem>>, vector<1x4x256xf32>
    %7 = vector.shape_cast %6 : vector<1x4x256xf32> to vector<4x256xf32>
    %cst = arith.constant dense<0.000000e+00> : vector<4xf32>
    %8 = vector.multi_reduction <add>, %1, %cst [1] : vector<4x256xf32> to vector<4xf32>
    %9 = vector.shape_cast %8 : vector<4xf32> to vector<4x1xf32>
    %cst_11 = arith.constant 2.560000e+02 : f32
    %10 = vector.broadcast %cst_11 : f32 to vector<4x1xf32>
    %11 = arith.divf %9, %10 : vector<4x1xf32>
    %cst_12 = arith.constant dense<0.000000e+00> : vector<4xf32>
    %12 = vector.multi_reduction <add>, %3, %cst_12 [1] : vector<4x256xf32> to vector<4xf32>
    %13 = vector.shape_cast %12 : vector<4xf32> to vector<4x1xf32>
    %cst_13 = arith.constant 2.560000e+02 : f32
    %14 = vector.broadcast %cst_13 : f32 to vector<4x1xf32>
    %15 = arith.divf %13, %14 : vector<4x1xf32>
    %cst_14 = arith.constant dense<0.000000e+00> : vector<4xf32>
    %16 = vector.multi_reduction <add>, %5, %cst_14 [1] : vector<4x256xf32> to vector<4xf32>
    %17 = vector.shape_cast %16 : vector<4xf32> to vector<4x1xf32>
    %cst_15 = arith.constant 2.560000e+02 : f32
    %18 = vector.broadcast %cst_15 : f32 to vector<4x1xf32>
    %19 = arith.divf %17, %18 : vector<4x1xf32>
    %cst_16 = arith.constant dense<0.000000e+00> : vector<4xf32>
    %20 = vector.multi_reduction <add>, %7, %cst_16 [1] : vector<4x256xf32> to vector<4xf32>
    %21 = vector.shape_cast %20 : vector<4xf32> to vector<4x1xf32>
    %cst_17 = arith.constant 2.560000e+02 : f32
    %22 = vector.broadcast %cst_17 : f32 to vector<4x1xf32>
    %23 = arith.divf %21, %22 : vector<4x1xf32>
    %24 = tpu.concatenate %11, %15, %19, %23 in 0 : vector<4x1xf32>, vector<4x1xf32>, vector<4x1xf32>, vector<4x1xf32> -> vector<16x1xf32>
    %cst_18 = arith.constant dense<0xFF800000> : vector<4xf32>
    %25 = vector.multi_reduction <maximumf>, %1, %cst_18 [1] : vector<4x256xf32> to vector<4xf32>
    %26 = vector.shape_cast %25 : vector<4xf32> to vector<4x1xf32>
    %cst_19 = arith.constant dense<0xFF800000> : vector<4xf32>
    %27 = vector.multi_reduction <maximumf>, %3, %cst_19 [1] : vector<4x256xf32> to vector<4xf32>
    %28 = vector.shape_cast %27 : vector<4xf32> to vector<4x1xf32>
    %cst_20 = arith.constant dense<0xFF800000> : vector<4xf32>
    %29 = vector.multi_reduction <maximumf>, %5, %cst_20 [1] : vector<4x256xf32> to vector<4xf32>
    %30 = vector.shape_cast %29 : vector<4xf32> to vector<4x1xf32>
    %cst_21 = arith.constant dense<0xFF800000> : vector<4xf32>
    %31 = vector.multi_reduction <maximumf>, %7, %cst_21 [1] : vector<4x256xf32> to vector<4xf32>
    %32 = vector.shape_cast %31 : vector<4xf32> to vector<4x1xf32>
    %33 = tpu.concatenate %26, %28, %30, %32 in 0 : vector<4x1xf32>, vector<4x1xf32>, vector<4x1xf32>, vector<4x1xf32> -> vector<16x1xf32>
    %c0_22 = arith.constant 0 : index
    %c0_23 = arith.constant 0 : index
    %34 = vector.load %arg5[%c0_22, %c0_23] : memref<16x1xf32, #tpu.memory_space<vmem>>, vector<16x1xf32>
    %c0_24 = arith.constant 0 : index
    %c0_25 = arith.constant 0 : index
    %35 = vector.load %arg6[%c0_24, %c0_25] : memref<16x1xf32, #tpu.memory_space<vmem>>, vector<16x1xf32>
    %36 = arith.mulf %34, %24 : vector<16x1xf32>
    %cst_26 = arith.constant dense<0.000000e+00> : vector<1xf32>
    %37 = vector.multi_reduction <add>, %36, %cst_26 [0] : vector<16x1xf32> to vector<1xf32>
    %38 = vector.shape_cast %37 : vector<1xf32> to vector<1x1xf32>
    %cst_27 = arith.constant 0.000000e+00 : f32
    %39 = vector.broadcast %cst_27 : f32 to vector<1x1xf32>
    %40 = arith.maximumf %38, %39 : vector<1x1xf32>
    %41 = vector.broadcast %40 : vector<1x1xf32> to vector<16x1xf32>
    %42 = arith.mulf %35, %41 : vector<16x1xf32>
    %cst_28 = arith.constant dense<0.000000e+00> : vector<16xf32>
    %43 = vector.multi_reduction <add>, %42, %cst_28 [1] : vector<16x1xf32> to vector<16xf32>
    %44 = vector.shape_cast %43 : vector<16xf32> to vector<16x1xf32>
    %45 = arith.mulf %34, %33 : vector<16x1xf32>
    %cst_29 = arith.constant dense<0.000000e+00> : vector<1xf32>
    %46 = vector.multi_reduction <add>, %45, %cst_29 [0] : vector<16x1xf32> to vector<1xf32>
    %47 = vector.shape_cast %46 : vector<1xf32> to vector<1x1xf32>
    %cst_30 = arith.constant 0.000000e+00 : f32
    %48 = vector.broadcast %cst_30 : f32 to vector<1x1xf32>
    %49 = arith.maximumf %47, %48 : vector<1x1xf32>
    %50 = vector.broadcast %49 : vector<1x1xf32> to vector<16x1xf32>
    %51 = arith.mulf %35, %50 : vector<16x1xf32>
    %cst_31 = arith.constant dense<0.000000e+00> : vector<16xf32>
    %52 = vector.multi_reduction <add>, %51, %cst_31 [1] : vector<16x1xf32> to vector<16xf32>
    %53 = vector.shape_cast %52 : vector<16xf32> to vector<16x1xf32>
    %54 = arith.addf %44, %53 : vector<16x1xf32>
    %55 = arith.negf %54 : vector<16x1xf32>
    %56 = math.exp %55 : vector<16x1xf32>
    %cst_32 = arith.constant 1.000000e+00 : f32
    %57 = vector.broadcast %cst_32 : f32 to vector<16x1xf32>
    %58 = arith.addf %57, %56 : vector<16x1xf32>
    %59 = arith.divf %57, %58 : vector<16x1xf32>
    %60 = vector.extract_strided_slice %59 {offsets = [0, 0], sizes = [4, 1], strides = [1, 1]} : vector<16x1xf32> to vector<4x1xf32>
    %61 = vector.extract_strided_slice %59 {offsets = [4, 0], sizes = [4, 1], strides = [1, 1]} : vector<16x1xf32> to vector<4x1xf32>
    %62 = vector.extract_strided_slice %59 {offsets = [8, 0], sizes = [4, 1], strides = [1, 1]} : vector<16x1xf32> to vector<4x1xf32>
    %63 = vector.extract_strided_slice %59 {offsets = [12, 0], sizes = [4, 1], strides = [1, 1]} : vector<16x1xf32> to vector<4x1xf32>
    %64 = vector.broadcast %60 : vector<4x1xf32> to vector<4x256xf32>
    %65 = arith.mulf %1, %64 : vector<4x256xf32>
    %cst_33 = arith.constant dense<0.000000e+00> : vector<256xf32>
    %66 = vector.multi_reduction <add>, %65, %cst_33 [0] : vector<4x256xf32> to vector<256xf32>
    %67 = vector.shape_cast %66 : vector<256xf32> to vector<1x256xf32>
    %cst_34 = arith.constant 4.000000e+00 : f32
    %68 = vector.broadcast %cst_34 : f32 to vector<1x256xf32>
    %69 = arith.divf %67, %68 : vector<1x256xf32>
    %cst_35 = arith.constant dense<0xFF800000> : vector<256xf32>
    %70 = vector.multi_reduction <maximumf>, %65, %cst_35 [0] : vector<4x256xf32> to vector<256xf32>
    %71 = vector.shape_cast %70 : vector<256xf32> to vector<1x256xf32>
    %72 = vector.broadcast %61 : vector<4x1xf32> to vector<4x256xf32>
    %73 = arith.mulf %3, %72 : vector<4x256xf32>
    %cst_36 = arith.constant dense<0.000000e+00> : vector<256xf32>
    %74 = vector.multi_reduction <add>, %73, %cst_36 [0] : vector<4x256xf32> to vector<256xf32>
    %75 = vector.shape_cast %74 : vector<256xf32> to vector<1x256xf32>
    %cst_37 = arith.constant 4.000000e+00 : f32
    %76 = vector.broadcast %cst_37 : f32 to vector<1x256xf32>
    %77 = arith.divf %75, %76 : vector<1x256xf32>
    %cst_38 = arith.constant dense<0xFF800000> : vector<256xf32>
    %78 = vector.multi_reduction <maximumf>, %73, %cst_38 [0] : vector<4x256xf32> to vector<256xf32>
    %79 = vector.shape_cast %78 : vector<256xf32> to vector<1x256xf32>
    %80 = vector.broadcast %62 : vector<4x1xf32> to vector<4x256xf32>
    %81 = arith.mulf %5, %80 : vector<4x256xf32>
    %cst_39 = arith.constant dense<0.000000e+00> : vector<256xf32>
    %82 = vector.multi_reduction <add>, %81, %cst_39 [0] : vector<4x256xf32> to vector<256xf32>
    %83 = vector.shape_cast %82 : vector<256xf32> to vector<1x256xf32>
    %cst_40 = arith.constant 4.000000e+00 : f32
    %84 = vector.broadcast %cst_40 : f32 to vector<1x256xf32>
    %85 = arith.divf %83, %84 : vector<1x256xf32>
    %cst_41 = arith.constant dense<0xFF800000> : vector<256xf32>
    %86 = vector.multi_reduction <maximumf>, %81, %cst_41 [0] : vector<4x256xf32> to vector<256xf32>
    %87 = vector.shape_cast %86 : vector<256xf32> to vector<1x256xf32>
    %88 = vector.broadcast %63 : vector<4x1xf32> to vector<4x256xf32>
    %89 = arith.mulf %7, %88 : vector<4x256xf32>
    %cst_42 = arith.constant dense<0.000000e+00> : vector<256xf32>
    %90 = vector.multi_reduction <add>, %89, %cst_42 [0] : vector<4x256xf32> to vector<256xf32>
    %91 = vector.shape_cast %90 : vector<256xf32> to vector<1x256xf32>
    %cst_43 = arith.constant 4.000000e+00 : f32
    %92 = vector.broadcast %cst_43 : f32 to vector<1x256xf32>
    %93 = arith.divf %91, %92 : vector<1x256xf32>
    %cst_44 = arith.constant dense<0xFF800000> : vector<256xf32>
    %94 = vector.multi_reduction <maximumf>, %89, %cst_44 [0] : vector<4x256xf32> to vector<256xf32>
    %95 = vector.shape_cast %94 : vector<256xf32> to vector<1x256xf32>
    %96 = tpu.concatenate %69, %77, %85, %93, %71, %79, %87, %95 in 0 : vector<1x256xf32>, vector<1x256xf32>, vector<1x256xf32>, vector<1x256xf32>, vector<1x256xf32>, vector<1x256xf32>, vector<1x256xf32>, vector<1x256xf32> -> vector<8x256xf32>
    %cst_45 = arith.constant 1.000000e+00 : f32
    %97 = vector.broadcast %cst_45 : f32 to vector<1x13xf32>
    %cst_46 = arith.constant 0.000000e+00 : f32
    %98 = vector.broadcast %cst_46 : f32 to vector<1x3xf32>
    %99 = tpu.concatenate %98, %97 in 1 : vector<1x3xf32>, vector<1x13xf32> -> vector<1x16xf32>
    %100 = tpu.concatenate %99, %99, %99, %99, %99, %99, %99, %99, %99, %99, %99, %99, %99, %99, %99, %99 in 1 : vector<1x16xf32>, vector<1x16xf32>, vector<1x16xf32>, vector<1x16xf32>, vector<1x16xf32>, vector<1x16xf32>, vector<1x16xf32>, vector<1x16xf32>, vector<1x16xf32>, vector<1x16xf32>, vector<1x16xf32>, vector<1x16xf32>, vector<1x16xf32>, vector<1x16xf32>, vector<1x16xf32>, vector<1x16xf32> -> vector<1x256xf32>
    %cst_47 = arith.constant 1.000000e+00 : f32
    %101 = vector.broadcast %cst_47 : f32 to vector<1x14xf32>
    %cst_48 = arith.constant 0.000000e+00 : f32
    %102 = vector.broadcast %cst_48 : f32 to vector<1x2xf32>
    %103 = tpu.concatenate %102, %101 in 1 : vector<1x2xf32>, vector<1x14xf32> -> vector<1x16xf32>
    %104 = tpu.concatenate %103, %103, %103, %103, %103, %103, %103, %103, %103, %103, %103, %103, %103, %103, %103, %103 in 1 : vector<1x16xf32>, vector<1x16xf32>, vector<1x16xf32>, vector<1x16xf32>, vector<1x16xf32>, vector<1x16xf32>, vector<1x16xf32>, vector<1x16xf32>, vector<1x16xf32>, vector<1x16xf32>, vector<1x16xf32>, vector<1x16xf32>, vector<1x16xf32>, vector<1x16xf32>, vector<1x16xf32>, vector<1x16xf32> -> vector<1x256xf32>
    %cst_49 = arith.constant 1.000000e+00 : f32
    %105 = vector.broadcast %cst_49 : f32 to vector<1x15xf32>
    %cst_50 = arith.constant 0.000000e+00 : f32
    %106 = vector.broadcast %cst_50 : f32 to vector<1x1xf32>
    %107 = tpu.concatenate %106, %105 in 1 : vector<1x1xf32>, vector<1x15xf32> -> vector<1x16xf32>
    %108 = tpu.concatenate %107, %107, %107, %107, %107, %107, %107, %107, %107, %107, %107, %107, %107, %107, %107, %107 in 1 : vector<1x16xf32>, vector<1x16xf32>, vector<1x16xf32>, vector<1x16xf32>, vector<1x16xf32>, vector<1x16xf32>, vector<1x16xf32>, vector<1x16xf32>, vector<1x16xf32>, vector<1x16xf32>, vector<1x16xf32>, vector<1x16xf32>, vector<1x16xf32>, vector<1x16xf32>, vector<1x16xf32>, vector<1x16xf32> -> vector<1x256xf32>
    %cst_51 = arith.constant 1.000000e+00 : f32
    %109 = vector.broadcast %cst_51 : f32 to vector<1x15xf32>
    %cst_52 = arith.constant 0.000000e+00 : f32
    %110 = vector.broadcast %cst_52 : f32 to vector<1x1xf32>
    %111 = tpu.concatenate %109, %110 in 1 : vector<1x15xf32>, vector<1x1xf32> -> vector<1x16xf32>
    %112 = tpu.concatenate %111, %111, %111, %111, %111, %111, %111, %111, %111, %111, %111, %111, %111, %111, %111, %111 in 1 : vector<1x16xf32>, vector<1x16xf32>, vector<1x16xf32>, vector<1x16xf32>, vector<1x16xf32>, vector<1x16xf32>, vector<1x16xf32>, vector<1x16xf32>, vector<1x16xf32>, vector<1x16xf32>, vector<1x16xf32>, vector<1x16xf32>, vector<1x16xf32>, vector<1x16xf32>, vector<1x16xf32>, vector<1x16xf32> -> vector<1x256xf32>
    %cst_53 = arith.constant 1.000000e+00 : f32
    %113 = vector.broadcast %cst_53 : f32 to vector<1x14xf32>
    %cst_54 = arith.constant 0.000000e+00 : f32
    %114 = vector.broadcast %cst_54 : f32 to vector<1x2xf32>
    %115 = tpu.concatenate %113, %114 in 1 : vector<1x14xf32>, vector<1x2xf32> -> vector<1x16xf32>
    %116 = tpu.concatenate %115, %115, %115, %115, %115, %115, %115, %115, %115, %115, %115, %115, %115, %115, %115, %115 in 1 : vector<1x16xf32>, vector<1x16xf32>, vector<1x16xf32>, vector<1x16xf32>, vector<1x16xf32>, vector<1x16xf32>, vector<1x16xf32>, vector<1x16xf32>, vector<1x16xf32>, vector<1x16xf32>, vector<1x16xf32>, vector<1x16xf32>, vector<1x16xf32>, vector<1x16xf32>, vector<1x16xf32>, vector<1x16xf32> -> vector<1x256xf32>
    %cst_55 = arith.constant 1.000000e+00 : f32
    %117 = vector.broadcast %cst_55 : f32 to vector<1x13xf32>
    %cst_56 = arith.constant 0.000000e+00 : f32
    %118 = vector.broadcast %cst_56 : f32 to vector<1x3xf32>
    %119 = tpu.concatenate %117, %118 in 1 : vector<1x13xf32>, vector<1x3xf32> -> vector<1x16xf32>
    %120 = tpu.concatenate %119, %119, %119, %119, %119, %119, %119, %119, %119, %119, %119, %119, %119, %119, %119, %119 in 1 : vector<1x16xf32>, vector<1x16xf32>, vector<1x16xf32>, vector<1x16xf32>, vector<1x16xf32>, vector<1x16xf32>, vector<1x16xf32>, vector<1x16xf32>, vector<1x16xf32>, vector<1x16xf32>, vector<1x16xf32>, vector<1x16xf32>, vector<1x16xf32>, vector<1x16xf32>, vector<1x16xf32>, vector<1x16xf32> -> vector<1x256xf32>
    %c0_57 = arith.constant 0 : index
    %c0_58 = arith.constant 0 : index
    %121 = vector.load %arg7[%c0_57, %c0_58] : memref<8x49xf32, #tpu.memory_space<vmem>>, vector<8x49xf32>
    %cst_59 = arith.constant 0.000000e+00 : f32
    %122 = vector.broadcast %cst_59 : f32 to vector<8x3xf32>
    %123 = vector.extract_strided_slice %96 {offsets = [0, 0], sizes = [8, 253], strides = [1, 1]} : vector<8x256xf32> to vector<8x253xf32>
    %124 = tpu.concatenate %122, %123 in 1 : vector<8x3xf32>, vector<8x253xf32> -> vector<8x256xf32>
    %125 = vector.broadcast %100 : vector<1x256xf32> to vector<8x256xf32>
    %126 = arith.mulf %124, %125 : vector<8x256xf32>
    %127 = vector.extract_strided_slice %121 {offsets = [0, 0], sizes = [8, 1], strides = [1, 1]} : vector<8x49xf32> to vector<8x1xf32>
    %128 = vector.broadcast %127 : vector<8x1xf32> to vector<8x256xf32>
    %129 = arith.mulf %126, %128 : vector<8x256xf32>
    %130 = vector.extract_strided_slice %121 {offsets = [0, 7], sizes = [8, 1], strides = [1, 1]} : vector<8x49xf32> to vector<8x1xf32>
    %131 = vector.broadcast %130 : vector<8x1xf32> to vector<8x256xf32>
    %132 = arith.mulf %126, %131 : vector<8x256xf32>
    %133 = vector.extract_strided_slice %121 {offsets = [0, 14], sizes = [8, 1], strides = [1, 1]} : vector<8x49xf32> to vector<8x1xf32>
    %134 = vector.broadcast %133 : vector<8x1xf32> to vector<8x256xf32>
    %135 = arith.mulf %126, %134 : vector<8x256xf32>
    %136 = vector.extract_strided_slice %121 {offsets = [0, 21], sizes = [8, 1], strides = [1, 1]} : vector<8x49xf32> to vector<8x1xf32>
    %137 = vector.broadcast %136 : vector<8x1xf32> to vector<8x256xf32>
    %138 = arith.mulf %126, %137 : vector<8x256xf32>
    %139 = vector.extract_strided_slice %121 {offsets = [0, 28], sizes = [8, 1], strides = [1, 1]} : vector<8x49xf32> to vector<8x1xf32>
    %140 = vector.broadcast %139 : vector<8x1xf32> to vector<8x256xf32>
    %141 = arith.mulf %126, %140 : vector<8x256xf32>
    %142 = vector.extract_strided_slice %121 {offsets = [0, 35], sizes = [8, 1], strides = [1, 1]} : vector<8x49xf32> to vector<8x1xf32>
    %143 = vector.broadcast %142 : vector<8x1xf32> to vector<8x256xf32>
    %144 = arith.mulf %126, %143 : vector<8x256xf32>
    %145 = vector.extract_strided_slice %121 {offsets = [0, 42], sizes = [8, 1], strides = [1, 1]} : vector<8x49xf32> to vector<8x1xf32>
    %146 = vector.broadcast %145 : vector<8x1xf32> to vector<8x256xf32>
    %147 = arith.mulf %126, %146 : vector<8x256xf32>
    %cst_60 = arith.constant 0.000000e+00 : f32
    %148 = vector.broadcast %cst_60 : f32 to vector<8x2xf32>
    %149 = vector.extract_strided_slice %96 {offsets = [0, 0], sizes = [8, 254], strides = [1, 1]} : vector<8x256xf32> to vector<8x254xf32>
    %150 = tpu.concatenate %148, %149 in 1 : vector<8x2xf32>, vector<8x254xf32> -> vector<8x256xf32>
    %151 = vector.broadcast %104 : vector<1x256xf32> to vector<8x256xf32>
    %152 = arith.mulf %150, %151 : vector<8x256xf32>
    %153 = vector.extract_strided_slice %121 {offsets = [0, 1], sizes = [8, 1], strides = [1, 1]} : vector<8x49xf32> to vector<8x1xf32>
    %154 = vector.broadcast %153 : vector<8x1xf32> to vector<8x256xf32>
    %155 = arith.mulf %152, %154 : vector<8x256xf32>
    %156 = arith.addf %129, %155 : vector<8x256xf32>
    %157 = vector.extract_strided_slice %121 {offsets = [0, 8], sizes = [8, 1], strides = [1, 1]} : vector<8x49xf32> to vector<8x1xf32>
    %158 = vector.broadcast %157 : vector<8x1xf32> to vector<8x256xf32>
    %159 = arith.mulf %152, %158 : vector<8x256xf32>
    %160 = arith.addf %132, %159 : vector<8x256xf32>
    %161 = vector.extract_strided_slice %121 {offsets = [0, 15], sizes = [8, 1], strides = [1, 1]} : vector<8x49xf32> to vector<8x1xf32>
    %162 = vector.broadcast %161 : vector<8x1xf32> to vector<8x256xf32>
    %163 = arith.mulf %152, %162 : vector<8x256xf32>
    %164 = arith.addf %135, %163 : vector<8x256xf32>
    %165 = vector.extract_strided_slice %121 {offsets = [0, 22], sizes = [8, 1], strides = [1, 1]} : vector<8x49xf32> to vector<8x1xf32>
    %166 = vector.broadcast %165 : vector<8x1xf32> to vector<8x256xf32>
    %167 = arith.mulf %152, %166 : vector<8x256xf32>
    %168 = arith.addf %138, %167 : vector<8x256xf32>
    %169 = vector.extract_strided_slice %121 {offsets = [0, 29], sizes = [8, 1], strides = [1, 1]} : vector<8x49xf32> to vector<8x1xf32>
    %170 = vector.broadcast %169 : vector<8x1xf32> to vector<8x256xf32>
    %171 = arith.mulf %152, %170 : vector<8x256xf32>
    %172 = arith.addf %141, %171 : vector<8x256xf32>
    %173 = vector.extract_strided_slice %121 {offsets = [0, 36], sizes = [8, 1], strides = [1, 1]} : vector<8x49xf32> to vector<8x1xf32>
    %174 = vector.broadcast %173 : vector<8x1xf32> to vector<8x256xf32>
    %175 = arith.mulf %152, %174 : vector<8x256xf32>
    %176 = arith.addf %144, %175 : vector<8x256xf32>
    %177 = vector.extract_strided_slice %121 {offsets = [0, 43], sizes = [8, 1], strides = [1, 1]} : vector<8x49xf32> to vector<8x1xf32>
    %178 = vector.broadcast %177 : vector<8x1xf32> to vector<8x256xf32>
    %179 = arith.mulf %152, %178 : vector<8x256xf32>
    %180 = arith.addf %147, %179 : vector<8x256xf32>
    %cst_61 = arith.constant 0.000000e+00 : f32
    %181 = vector.broadcast %cst_61 : f32 to vector<8x1xf32>
    %182 = vector.extract_strided_slice %96 {offsets = [0, 0], sizes = [8, 255], strides = [1, 1]} : vector<8x256xf32> to vector<8x255xf32>
    %183 = tpu.concatenate %181, %182 in 1 : vector<8x1xf32>, vector<8x255xf32> -> vector<8x256xf32>
    %184 = vector.broadcast %108 : vector<1x256xf32> to vector<8x256xf32>
    %185 = arith.mulf %183, %184 : vector<8x256xf32>
    %186 = vector.extract_strided_slice %121 {offsets = [0, 2], sizes = [8, 1], strides = [1, 1]} : vector<8x49xf32> to vector<8x1xf32>
    %187 = vector.broadcast %186 : vector<8x1xf32> to vector<8x256xf32>
    %188 = arith.mulf %185, %187 : vector<8x256xf32>
    %189 = arith.addf %156, %188 : vector<8x256xf32>
    %190 = vector.extract_strided_slice %121 {offsets = [0, 9], sizes = [8, 1], strides = [1, 1]} : vector<8x49xf32> to vector<8x1xf32>
    %191 = vector.broadcast %190 : vector<8x1xf32> to vector<8x256xf32>
    %192 = arith.mulf %185, %191 : vector<8x256xf32>
    %193 = arith.addf %160, %192 : vector<8x256xf32>
    %194 = vector.extract_strided_slice %121 {offsets = [0, 16], sizes = [8, 1], strides = [1, 1]} : vector<8x49xf32> to vector<8x1xf32>
    %195 = vector.broadcast %194 : vector<8x1xf32> to vector<8x256xf32>
    %196 = arith.mulf %185, %195 : vector<8x256xf32>
    %197 = arith.addf %164, %196 : vector<8x256xf32>
    %198 = vector.extract_strided_slice %121 {offsets = [0, 23], sizes = [8, 1], strides = [1, 1]} : vector<8x49xf32> to vector<8x1xf32>
    %199 = vector.broadcast %198 : vector<8x1xf32> to vector<8x256xf32>
    %200 = arith.mulf %185, %199 : vector<8x256xf32>
    %201 = arith.addf %168, %200 : vector<8x256xf32>
    %202 = vector.extract_strided_slice %121 {offsets = [0, 30], sizes = [8, 1], strides = [1, 1]} : vector<8x49xf32> to vector<8x1xf32>
    %203 = vector.broadcast %202 : vector<8x1xf32> to vector<8x256xf32>
    %204 = arith.mulf %185, %203 : vector<8x256xf32>
    %205 = arith.addf %172, %204 : vector<8x256xf32>
    %206 = vector.extract_strided_slice %121 {offsets = [0, 37], sizes = [8, 1], strides = [1, 1]} : vector<8x49xf32> to vector<8x1xf32>
    %207 = vector.broadcast %206 : vector<8x1xf32> to vector<8x256xf32>
    %208 = arith.mulf %185, %207 : vector<8x256xf32>
    %209 = arith.addf %176, %208 : vector<8x256xf32>
    %210 = vector.extract_strided_slice %121 {offsets = [0, 44], sizes = [8, 1], strides = [1, 1]} : vector<8x49xf32> to vector<8x1xf32>
    %211 = vector.broadcast %210 : vector<8x1xf32> to vector<8x256xf32>
    %212 = arith.mulf %185, %211 : vector<8x256xf32>
    %213 = arith.addf %180, %212 : vector<8x256xf32>
    %214 = vector.extract_strided_slice %121 {offsets = [0, 3], sizes = [8, 1], strides = [1, 1]} : vector<8x49xf32> to vector<8x1xf32>
    %215 = vector.broadcast %214 : vector<8x1xf32> to vector<8x256xf32>
    %216 = arith.mulf %96, %215 : vector<8x256xf32>
    %217 = arith.addf %189, %216 : vector<8x256xf32>
    %218 = vector.extract_strided_slice %121 {offsets = [0, 10], sizes = [8, 1], strides = [1, 1]} : vector<8x49xf32> to vector<8x1xf32>
    %219 = vector.broadcast %218 : vector<8x1xf32> to vector<8x256xf32>
    %220 = arith.mulf %96, %219 : vector<8x256xf32>
    %221 = arith.addf %193, %220 : vector<8x256xf32>
    %222 = vector.extract_strided_slice %121 {offsets = [0, 17], sizes = [8, 1], strides = [1, 1]} : vector<8x49xf32> to vector<8x1xf32>
    %223 = vector.broadcast %222 : vector<8x1xf32> to vector<8x256xf32>
    %224 = arith.mulf %96, %223 : vector<8x256xf32>
    %225 = arith.addf %197, %224 : vector<8x256xf32>
    %226 = vector.extract_strided_slice %121 {offsets = [0, 24], sizes = [8, 1], strides = [1, 1]} : vector<8x49xf32> to vector<8x1xf32>
    %227 = vector.broadcast %226 : vector<8x1xf32> to vector<8x256xf32>
    %228 = arith.mulf %96, %227 : vector<8x256xf32>
    %229 = arith.addf %201, %228 : vector<8x256xf32>
    %230 = vector.extract_strided_slice %121 {offsets = [0, 31], sizes = [8, 1], strides = [1, 1]} : vector<8x49xf32> to vector<8x1xf32>
    %231 = vector.broadcast %230 : vector<8x1xf32> to vector<8x256xf32>
    %232 = arith.mulf %96, %231 : vector<8x256xf32>
    %233 = arith.addf %205, %232 : vector<8x256xf32>
    %234 = vector.extract_strided_slice %121 {offsets = [0, 38], sizes = [8, 1], strides = [1, 1]} : vector<8x49xf32> to vector<8x1xf32>
    %235 = vector.broadcast %234 : vector<8x1xf32> to vector<8x256xf32>
    %236 = arith.mulf %96, %235 : vector<8x256xf32>
    %237 = arith.addf %209, %236 : vector<8x256xf32>
    %238 = vector.extract_strided_slice %121 {offsets = [0, 45], sizes = [8, 1], strides = [1, 1]} : vector<8x49xf32> to vector<8x1xf32>
    %239 = vector.broadcast %238 : vector<8x1xf32> to vector<8x256xf32>
    %240 = arith.mulf %96, %239 : vector<8x256xf32>
    %241 = arith.addf %213, %240 : vector<8x256xf32>
    %cst_62 = arith.constant 0.000000e+00 : f32
    %242 = vector.broadcast %cst_62 : f32 to vector<8x1xf32>
    %243 = vector.extract_strided_slice %96 {offsets = [0, 1], sizes = [8, 255], strides = [1, 1]} : vector<8x256xf32> to vector<8x255xf32>
    %244 = tpu.concatenate %243, %242 in 1 : vector<8x255xf32>, vector<8x1xf32> -> vector<8x256xf32>
    %245 = vector.broadcast %112 : vector<1x256xf32> to vector<8x256xf32>
    %246 = arith.mulf %244, %245 : vector<8x256xf32>
    %247 = vector.extract_strided_slice %121 {offsets = [0, 4], sizes = [8, 1], strides = [1, 1]} : vector<8x49xf32> to vector<8x1xf32>
    %248 = vector.broadcast %247 : vector<8x1xf32> to vector<8x256xf32>
    %249 = arith.mulf %246, %248 : vector<8x256xf32>
    %250 = arith.addf %217, %249 : vector<8x256xf32>
    %251 = vector.extract_strided_slice %121 {offsets = [0, 11], sizes = [8, 1], strides = [1, 1]} : vector<8x49xf32> to vector<8x1xf32>
    %252 = vector.broadcast %251 : vector<8x1xf32> to vector<8x256xf32>
    %253 = arith.mulf %246, %252 : vector<8x256xf32>
    %254 = arith.addf %221, %253 : vector<8x256xf32>
    %255 = vector.extract_strided_slice %121 {offsets = [0, 18], sizes = [8, 1], strides = [1, 1]} : vector<8x49xf32> to vector<8x1xf32>
    %256 = vector.broadcast %255 : vector<8x1xf32> to vector<8x256xf32>
    %257 = arith.mulf %246, %256 : vector<8x256xf32>
    %258 = arith.addf %225, %257 : vector<8x256xf32>
    %259 = vector.extract_strided_slice %121 {offsets = [0, 25], sizes = [8, 1], strides = [1, 1]} : vector<8x49xf32> to vector<8x1xf32>
    %260 = vector.broadcast %259 : vector<8x1xf32> to vector<8x256xf32>
    %261 = arith.mulf %246, %260 : vector<8x256xf32>
    %262 = arith.addf %229, %261 : vector<8x256xf32>
    %263 = vector.extract_strided_slice %121 {offsets = [0, 32], sizes = [8, 1], strides = [1, 1]} : vector<8x49xf32> to vector<8x1xf32>
    %264 = vector.broadcast %263 : vector<8x1xf32> to vector<8x256xf32>
    %265 = arith.mulf %246, %264 : vector<8x256xf32>
    %266 = arith.addf %233, %265 : vector<8x256xf32>
    %267 = vector.extract_strided_slice %121 {offsets = [0, 39], sizes = [8, 1], strides = [1, 1]} : vector<8x49xf32> to vector<8x1xf32>
    %268 = vector.broadcast %267 : vector<8x1xf32> to vector<8x256xf32>
    %269 = arith.mulf %246, %268 : vector<8x256xf32>
    %270 = arith.addf %237, %269 : vector<8x256xf32>
    %271 = vector.extract_strided_slice %121 {offsets = [0, 46], sizes = [8, 1], strides = [1, 1]} : vector<8x49xf32> to vector<8x1xf32>
    %272 = vector.broadcast %271 : vector<8x1xf32> to vector<8x256xf32>
    %273 = arith.mulf %246, %272 : vector<8x256xf32>
    %274 = arith.addf %241, %273 : vector<8x256xf32>
    %cst_63 = arith.constant 0.000000e+00 : f32
    %275 = vector.broadcast %cst_63 : f32 to vector<8x2xf32>
    %276 = vector.extract_strided_slice %96 {offsets = [0, 2], sizes = [8, 254], strides = [1, 1]} : vector<8x256xf32> to vector<8x254xf32>
    %277 = tpu.concatenate %276, %275 in 1 : vector<8x254xf32>, vector<8x2xf32> -> vector<8x256xf32>
    %278 = vector.broadcast %116 : vector<1x256xf32> to vector<8x256xf32>
    %279 = arith.mulf %277, %278 : vector<8x256xf32>
    %280 = vector.extract_strided_slice %121 {offsets = [0, 5], sizes = [8, 1], strides = [1, 1]} : vector<8x49xf32> to vector<8x1xf32>
    %281 = vector.broadcast %280 : vector<8x1xf32> to vector<8x256xf32>
    %282 = arith.mulf %279, %281 : vector<8x256xf32>
    %283 = arith.addf %250, %282 : vector<8x256xf32>
    %284 = vector.extract_strided_slice %121 {offsets = [0, 12], sizes = [8, 1], strides = [1, 1]} : vector<8x49xf32> to vector<8x1xf32>
    %285 = vector.broadcast %284 : vector<8x1xf32> to vector<8x256xf32>
    %286 = arith.mulf %279, %285 : vector<8x256xf32>
    %287 = arith.addf %254, %286 : vector<8x256xf32>
    %288 = vector.extract_strided_slice %121 {offsets = [0, 19], sizes = [8, 1], strides = [1, 1]} : vector<8x49xf32> to vector<8x1xf32>
    %289 = vector.broadcast %288 : vector<8x1xf32> to vector<8x256xf32>
    %290 = arith.mulf %279, %289 : vector<8x256xf32>
    %291 = arith.addf %258, %290 : vector<8x256xf32>
    %292 = vector.extract_strided_slice %121 {offsets = [0, 26], sizes = [8, 1], strides = [1, 1]} : vector<8x49xf32> to vector<8x1xf32>
    %293 = vector.broadcast %292 : vector<8x1xf32> to vector<8x256xf32>
    %294 = arith.mulf %279, %293 : vector<8x256xf32>
    %295 = arith.addf %262, %294 : vector<8x256xf32>
    %296 = vector.extract_strided_slice %121 {offsets = [0, 33], sizes = [8, 1], strides = [1, 1]} : vector<8x49xf32> to vector<8x1xf32>
    %297 = vector.broadcast %296 : vector<8x1xf32> to vector<8x256xf32>
    %298 = arith.mulf %279, %297 : vector<8x256xf32>
    %299 = arith.addf %266, %298 : vector<8x256xf32>
    %300 = vector.extract_strided_slice %121 {offsets = [0, 40], sizes = [8, 1], strides = [1, 1]} : vector<8x49xf32> to vector<8x1xf32>
    %301 = vector.broadcast %300 : vector<8x1xf32> to vector<8x256xf32>
    %302 = arith.mulf %279, %301 : vector<8x256xf32>
    %303 = arith.addf %270, %302 : vector<8x256xf32>
    %304 = vector.extract_strided_slice %121 {offsets = [0, 47], sizes = [8, 1], strides = [1, 1]} : vector<8x49xf32> to vector<8x1xf32>
    %305 = vector.broadcast %304 : vector<8x1xf32> to vector<8x256xf32>
    %306 = arith.mulf %279, %305 : vector<8x256xf32>
    %307 = arith.addf %274, %306 : vector<8x256xf32>
    %cst_64 = arith.constant 0.000000e+00 : f32
    %308 = vector.broadcast %cst_64 : f32 to vector<8x3xf32>
    %309 = vector.extract_strided_slice %96 {offsets = [0, 3], sizes = [8, 253], strides = [1, 1]} : vector<8x256xf32> to vector<8x253xf32>
    %310 = tpu.concatenate %309, %308 in 1 : vector<8x253xf32>, vector<8x3xf32> -> vector<8x256xf32>
    %311 = vector.broadcast %120 : vector<1x256xf32> to vector<8x256xf32>
    %312 = arith.mulf %310, %311 : vector<8x256xf32>
    %313 = vector.extract_strided_slice %121 {offsets = [0, 6], sizes = [8, 1], strides = [1, 1]} : vector<8x49xf32> to vector<8x1xf32>
    %314 = vector.broadcast %313 : vector<8x1xf32> to vector<8x256xf32>
    %315 = arith.mulf %312, %314 : vector<8x256xf32>
    %316 = arith.addf %283, %315 : vector<8x256xf32>
    %317 = vector.extract_strided_slice %121 {offsets = [0, 13], sizes = [8, 1], strides = [1, 1]} : vector<8x49xf32> to vector<8x1xf32>
    %318 = vector.broadcast %317 : vector<8x1xf32> to vector<8x256xf32>
    %319 = arith.mulf %312, %318 : vector<8x256xf32>
    %320 = arith.addf %287, %319 : vector<8x256xf32>
    %321 = vector.extract_strided_slice %121 {offsets = [0, 20], sizes = [8, 1], strides = [1, 1]} : vector<8x49xf32> to vector<8x1xf32>
    %322 = vector.broadcast %321 : vector<8x1xf32> to vector<8x256xf32>
    %323 = arith.mulf %312, %322 : vector<8x256xf32>
    %324 = arith.addf %291, %323 : vector<8x256xf32>
    %325 = vector.extract_strided_slice %121 {offsets = [0, 27], sizes = [8, 1], strides = [1, 1]} : vector<8x49xf32> to vector<8x1xf32>
    %326 = vector.broadcast %325 : vector<8x1xf32> to vector<8x256xf32>
    %327 = arith.mulf %312, %326 : vector<8x256xf32>
    %328 = arith.addf %295, %327 : vector<8x256xf32>
    %329 = vector.extract_strided_slice %121 {offsets = [0, 34], sizes = [8, 1], strides = [1, 1]} : vector<8x49xf32> to vector<8x1xf32>
    %330 = vector.broadcast %329 : vector<8x1xf32> to vector<8x256xf32>
    %331 = arith.mulf %312, %330 : vector<8x256xf32>
    %332 = arith.addf %299, %331 : vector<8x256xf32>
    %333 = vector.extract_strided_slice %121 {offsets = [0, 41], sizes = [8, 1], strides = [1, 1]} : vector<8x49xf32> to vector<8x1xf32>
    %334 = vector.broadcast %333 : vector<8x1xf32> to vector<8x256xf32>
    %335 = arith.mulf %312, %334 : vector<8x256xf32>
    %336 = arith.addf %303, %335 : vector<8x256xf32>
    %337 = vector.extract_strided_slice %121 {offsets = [0, 48], sizes = [8, 1], strides = [1, 1]} : vector<8x49xf32> to vector<8x1xf32>
    %338 = vector.broadcast %337 : vector<8x1xf32> to vector<8x256xf32>
    %339 = arith.mulf %312, %338 : vector<8x256xf32>
    %340 = arith.addf %307, %339 : vector<8x256xf32>
    %cst_65 = arith.constant 0.000000e+00 : f32
    %341 = vector.broadcast %cst_65 : f32 to vector<8x48xf32>
    %342 = vector.extract_strided_slice %316 {offsets = [0, 0], sizes = [8, 208], strides = [1, 1]} : vector<8x256xf32> to vector<8x208xf32>
    %343 = tpu.concatenate %341, %342 in 1 : vector<8x48xf32>, vector<8x208xf32> -> vector<8x256xf32>
    %cst_66 = arith.constant 0.000000e+00 : f32
    %344 = vector.broadcast %cst_66 : f32 to vector<8x32xf32>
    %345 = vector.extract_strided_slice %320 {offsets = [0, 0], sizes = [8, 224], strides = [1, 1]} : vector<8x256xf32> to vector<8x224xf32>
    %346 = tpu.concatenate %344, %345 in 1 : vector<8x32xf32>, vector<8x224xf32> -> vector<8x256xf32>
    %347 = arith.addf %343, %346 : vector<8x256xf32>
    %cst_67 = arith.constant 0.000000e+00 : f32
    %348 = vector.broadcast %cst_67 : f32 to vector<8x16xf32>
    %349 = vector.extract_strided_slice %324 {offsets = [0, 0], sizes = [8, 240], strides = [1, 1]} : vector<8x256xf32> to vector<8x240xf32>
    %350 = tpu.concatenate %348, %349 in 1 : vector<8x16xf32>, vector<8x240xf32> -> vector<8x256xf32>
    %351 = arith.addf %347, %350 : vector<8x256xf32>
    %352 = arith.addf %351, %328 : vector<8x256xf32>
    %cst_68 = arith.constant 0.000000e+00 : f32
    %353 = vector.broadcast %cst_68 : f32 to vector<8x16xf32>
    %354 = vector.extract_strided_slice %332 {offsets = [0, 16], sizes = [8, 240], strides = [1, 1]} : vector<8x256xf32> to vector<8x240xf32>
    %355 = tpu.concatenate %354, %353 in 1 : vector<8x240xf32>, vector<8x16xf32> -> vector<8x256xf32>
    %356 = arith.addf %352, %355 : vector<8x256xf32>
    %cst_69 = arith.constant 0.000000e+00 : f32
    %357 = vector.broadcast %cst_69 : f32 to vector<8x32xf32>
    %358 = vector.extract_strided_slice %336 {offsets = [0, 32], sizes = [8, 224], strides = [1, 1]} : vector<8x256xf32> to vector<8x224xf32>
    %359 = tpu.concatenate %358, %357 in 1 : vector<8x224xf32>, vector<8x32xf32> -> vector<8x256xf32>
    %360 = arith.addf %356, %359 : vector<8x256xf32>
    %cst_70 = arith.constant 0.000000e+00 : f32
    %361 = vector.broadcast %cst_70 : f32 to vector<8x48xf32>
    %362 = vector.extract_strided_slice %340 {offsets = [0, 48], sizes = [8, 208], strides = [1, 1]} : vector<8x256xf32> to vector<8x208xf32>
    %363 = tpu.concatenate %362, %361 in 1 : vector<8x208xf32>, vector<8x48xf32> -> vector<8x256xf32>
    %364 = arith.addf %360, %363 : vector<8x256xf32>
    %365 = vector.extract_strided_slice %364 {offsets = [0, 0], sizes = [4, 256], strides = [1, 1]} : vector<8x256xf32> to vector<4x256xf32>
    %366 = vector.extract_strided_slice %364 {offsets = [4, 0], sizes = [4, 256], strides = [1, 1]} : vector<8x256xf32> to vector<4x256xf32>
    %367 = arith.addf %365, %366 : vector<4x256xf32>
    %368 = arith.negf %367 : vector<4x256xf32>
    %369 = math.exp %368 : vector<4x256xf32>
    %cst_71 = arith.constant 1.000000e+00 : f32
    %370 = vector.broadcast %cst_71 : f32 to vector<4x256xf32>
    %371 = arith.addf %370, %369 : vector<4x256xf32>
    %372 = arith.divf %370, %371 : vector<4x256xf32>
    %cst_72 = arith.constant 0.000000e+00 : f32
    %373 = vector.broadcast %cst_72 : f32 to vector<1x256xf32>
    %374 = vector.extract_strided_slice %372 {offsets = [1, 0], sizes = [3, 256], strides = [1, 1]} : vector<4x256xf32> to vector<3x256xf32>
    %375 = tpu.concatenate %374, %373 in 0 : vector<3x256xf32>, vector<1x256xf32> -> vector<4x256xf32>
    %376 = vector.extract_strided_slice %372 {offsets = [0, 0], sizes = [3, 256], strides = [1, 1]} : vector<4x256xf32> to vector<3x256xf32>
    %377 = tpu.concatenate %373, %376 in 0 : vector<1x256xf32>, vector<3x256xf32> -> vector<4x256xf32>
    %cst_73 = arith.constant 0.000000e+00 : f32
    %378 = vector.broadcast %cst_73 : f32 to vector<4x16xf32>
    %379 = vector.extract_strided_slice %372 {offsets = [0, 16], sizes = [4, 240], strides = [1, 1]} : vector<4x256xf32> to vector<4x240xf32>
    %380 = tpu.concatenate %379, %378 in 1 : vector<4x240xf32>, vector<4x16xf32> -> vector<4x256xf32>
    %cst_74 = arith.constant 0.000000e+00 : f32
    %381 = vector.broadcast %cst_74 : f32 to vector<4x240xf32>
    %382 = vector.extract_strided_slice %375 {offsets = [0, 0], sizes = [4, 16], strides = [1, 1]} : vector<4x256xf32> to vector<4x16xf32>
    %383 = tpu.concatenate %381, %382 in 1 : vector<4x240xf32>, vector<4x16xf32> -> vector<4x256xf32>
    %384 = arith.addf %380, %383 : vector<4x256xf32>
    %cst_75 = arith.constant 0.000000e+00 : f32
    %385 = vector.broadcast %cst_75 : f32 to vector<4x16xf32>
    %386 = vector.extract_strided_slice %372 {offsets = [0, 0], sizes = [4, 240], strides = [1, 1]} : vector<4x256xf32> to vector<4x240xf32>
    %387 = tpu.concatenate %385, %386 in 1 : vector<4x16xf32>, vector<4x240xf32> -> vector<4x256xf32>
    %cst_76 = arith.constant 0.000000e+00 : f32
    %388 = vector.broadcast %cst_76 : f32 to vector<4x240xf32>
    %389 = vector.extract_strided_slice %377 {offsets = [0, 240], sizes = [4, 16], strides = [1, 1]} : vector<4x256xf32> to vector<4x16xf32>
    %390 = tpu.concatenate %389, %388 in 1 : vector<4x16xf32>, vector<4x240xf32> -> vector<4x256xf32>
    %391 = arith.addf %387, %390 : vector<4x256xf32>
    %cst_77 = arith.constant 0.000000e+00 : f32
    %392 = vector.broadcast %cst_77 : f32 to vector<4x1xf32>
    %393 = vector.extract_strided_slice %391 {offsets = [0, 0], sizes = [4, 255], strides = [1, 1]} : vector<4x256xf32> to vector<4x255xf32>
    %394 = tpu.concatenate %392, %393 in 1 : vector<4x1xf32>, vector<4x255xf32> -> vector<4x256xf32>
    %c0_78 = arith.constant 0 : index
    %395 = memref.load %arg8[%c0_78] : memref<9xf32, #tpu.memory_space<smem>>
    %396 = vector.broadcast %395 : f32 to vector<4x256xf32>
    %397 = arith.mulf %394, %396 : vector<4x256xf32>
    %cst_79 = arith.constant 0.000000e+00 : f32
    %398 = vector.broadcast %cst_79 : f32 to vector<4x1xf32>
    %399 = vector.extract_strided_slice %372 {offsets = [0, 0], sizes = [4, 255], strides = [1, 1]} : vector<4x256xf32> to vector<4x255xf32>
    %400 = tpu.concatenate %398, %399 in 1 : vector<4x1xf32>, vector<4x255xf32> -> vector<4x256xf32>
    %c3 = arith.constant 3 : index
    %401 = memref.load %arg8[%c3] : memref<9xf32, #tpu.memory_space<smem>>
    %402 = vector.broadcast %401 : f32 to vector<4x256xf32>
    %403 = arith.mulf %400, %402 : vector<4x256xf32>
    %404 = arith.addf %397, %403 : vector<4x256xf32>
    %cst_80 = arith.constant 0.000000e+00 : f32
    %405 = vector.broadcast %cst_80 : f32 to vector<4x1xf32>
    %406 = vector.extract_strided_slice %384 {offsets = [0, 0], sizes = [4, 255], strides = [1, 1]} : vector<4x256xf32> to vector<4x255xf32>
    %407 = tpu.concatenate %405, %406 in 1 : vector<4x1xf32>, vector<4x255xf32> -> vector<4x256xf32>
    %c6 = arith.constant 6 : index
    %408 = memref.load %arg8[%c6] : memref<9xf32, #tpu.memory_space<smem>>
    %409 = vector.broadcast %408 : f32 to vector<4x256xf32>
    %410 = arith.mulf %407, %409 : vector<4x256xf32>
    %411 = arith.addf %404, %410 : vector<4x256xf32>
    %412 = vector.broadcast %108 : vector<1x256xf32> to vector<4x256xf32>
    %413 = arith.mulf %411, %412 : vector<4x256xf32>
    %c1 = arith.constant 1 : index
    %414 = memref.load %arg8[%c1] : memref<9xf32, #tpu.memory_space<smem>>
    %415 = vector.broadcast %414 : f32 to vector<4x256xf32>
    %416 = arith.mulf %391, %415 : vector<4x256xf32>
    %c4 = arith.constant 4 : index
    %417 = memref.load %arg8[%c4] : memref<9xf32, #tpu.memory_space<smem>>
    %418 = vector.broadcast %417 : f32 to vector<4x256xf32>
    %419 = arith.mulf %372, %418 : vector<4x256xf32>
    %420 = arith.addf %416, %419 : vector<4x256xf32>
    %c7 = arith.constant 7 : index
    %421 = memref.load %arg8[%c7] : memref<9xf32, #tpu.memory_space<smem>>
    %422 = vector.broadcast %421 : f32 to vector<4x256xf32>
    %423 = arith.mulf %384, %422 : vector<4x256xf32>
    %424 = arith.addf %420, %423 : vector<4x256xf32>
    %425 = arith.addf %413, %424 : vector<4x256xf32>
    %cst_81 = arith.constant 0.000000e+00 : f32
    %426 = vector.broadcast %cst_81 : f32 to vector<4x1xf32>
    %427 = vector.extract_strided_slice %391 {offsets = [0, 1], sizes = [4, 255], strides = [1, 1]} : vector<4x256xf32> to vector<4x255xf32>
    %428 = tpu.concatenate %427, %426 in 1 : vector<4x255xf32>, vector<4x1xf32> -> vector<4x256xf32>
    %c2 = arith.constant 2 : index
    %429 = memref.load %arg8[%c2] : memref<9xf32, #tpu.memory_space<smem>>
    %430 = vector.broadcast %429 : f32 to vector<4x256xf32>
    %431 = arith.mulf %428, %430 : vector<4x256xf32>
    %cst_82 = arith.constant 0.000000e+00 : f32
    %432 = vector.broadcast %cst_82 : f32 to vector<4x1xf32>
    %433 = vector.extract_strided_slice %372 {offsets = [0, 1], sizes = [4, 255], strides = [1, 1]} : vector<4x256xf32> to vector<4x255xf32>
    %434 = tpu.concatenate %433, %432 in 1 : vector<4x255xf32>, vector<4x1xf32> -> vector<4x256xf32>
    %c5 = arith.constant 5 : index
    %435 = memref.load %arg8[%c5] : memref<9xf32, #tpu.memory_space<smem>>
    %436 = vector.broadcast %435 : f32 to vector<4x256xf32>
    %437 = arith.mulf %434, %436 : vector<4x256xf32>
    %438 = arith.addf %431, %437 : vector<4x256xf32>
    %cst_83 = arith.constant 0.000000e+00 : f32
    %439 = vector.broadcast %cst_83 : f32 to vector<4x1xf32>
    %440 = vector.extract_strided_slice %384 {offsets = [0, 1], sizes = [4, 255], strides = [1, 1]} : vector<4x256xf32> to vector<4x255xf32>
    %441 = tpu.concatenate %440, %439 in 1 : vector<4x255xf32>, vector<4x1xf32> -> vector<4x256xf32>
    %c8 = arith.constant 8 : index
    %442 = memref.load %arg8[%c8] : memref<9xf32, #tpu.memory_space<smem>>
    %443 = vector.broadcast %442 : f32 to vector<4x256xf32>
    %444 = arith.mulf %441, %443 : vector<4x256xf32>
    %445 = arith.addf %438, %444 : vector<4x256xf32>
    %446 = vector.broadcast %112 : vector<1x256xf32> to vector<4x256xf32>
    %447 = arith.mulf %445, %446 : vector<4x256xf32>
    %448 = arith.addf %425, %447 : vector<4x256xf32>
    %cst_84 = arith.constant 0.0416666679 : f32
    %449 = vector.broadcast %cst_84 : f32 to vector<4x256xf32>
    %450 = arith.mulf %448, %449 : vector<4x256xf32>
    %cst_85 = arith.constant 0.166666672 : f32
    %451 = vector.broadcast %cst_85 : f32 to vector<4x256xf32>
    %452 = arith.addf %451, %450 : vector<4x256xf32>
    %453 = arith.mulf %448, %452 : vector<4x256xf32>
    %cst_86 = arith.constant 5.000000e-01 : f32
    %454 = vector.broadcast %cst_86 : f32 to vector<4x256xf32>
    %455 = arith.addf %454, %453 : vector<4x256xf32>
    %456 = arith.mulf %448, %455 : vector<4x256xf32>
    %cst_87 = arith.constant 1.000000e+00 : f32
    %457 = vector.broadcast %cst_87 : f32 to vector<4x256xf32>
    %458 = arith.addf %457, %456 : vector<4x256xf32>
    %459 = arith.mulf %448, %458 : vector<4x256xf32>
    %cst_88 = arith.constant 1.000000e+00 : f32
    %460 = vector.broadcast %cst_88 : f32 to vector<4x256xf32>
    %461 = arith.addf %460, %459 : vector<4x256xf32>
    %cst_89 = arith.constant dense<0.000000e+00> : vector<256xf32>
    %462 = vector.multi_reduction <add>, %461, %cst_89 [0] : vector<4x256xf32> to vector<256xf32>
    %463 = vector.shape_cast %462 : vector<256xf32> to vector<1x256xf32>
    %c128_i32 = arith.constant 128 : i32
    %464 = tpu.dynamic_rotate %463 by %c128_i32 dim 1 : vector<1x256xf32>, i32 -> vector<1x256xf32>
    %465 = arith.addf %463, %464 : vector<1x256xf32>
    %c64_i32 = arith.constant 64 : i32
    %466 = tpu.dynamic_rotate %465 by %c64_i32 dim 1 : vector<1x256xf32>, i32 -> vector<1x256xf32>
    %467 = arith.addf %465, %466 : vector<1x256xf32>
    %c32_i32 = arith.constant 32 : i32
    %468 = tpu.dynamic_rotate %467 by %c32_i32 dim 1 : vector<1x256xf32>, i32 -> vector<1x256xf32>
    %469 = arith.addf %467, %468 : vector<1x256xf32>
    %c16_i32 = arith.constant 16 : i32
    %470 = tpu.dynamic_rotate %469 by %c16_i32 dim 1 : vector<1x256xf32>, i32 -> vector<1x256xf32>
    %471 = arith.addf %469, %470 : vector<1x256xf32>
    %472 = tpu.reciprocal %471 : vector<1x256xf32> -> vector<1x256xf32>
    %473 = vector.broadcast %472 : vector<1x256xf32> to vector<4x256xf32>
    %474 = arith.mulf %461, %473 : vector<4x256xf32>
    %475 = vector.extract_strided_slice %474 {offsets = [0, 0], sizes = [1, 256], strides = [1, 1]} : vector<4x256xf32> to vector<1x256xf32>
    %476 = vector.broadcast %60 : vector<4x1xf32> to vector<4x256xf32>
    %477 = vector.broadcast %475 : vector<1x256xf32> to vector<4x256xf32>
    %478 = arith.mulf %476, %477 : vector<4x256xf32>
    %479 = arith.mulf %1, %478 : vector<4x256xf32>
    %c0_90 = arith.constant 0 : index
    %c0_91 = arith.constant 0 : index
    %c0_92 = arith.constant 0 : index
    %480 = vector.load %arg9[%c0_90, %c0_91, %c0_92] : memref<1x4x256xf32, #tpu.memory_space<vmem>>, vector<1x4x256xf32>
    %481 = vector.shape_cast %480 : vector<1x4x256xf32> to vector<4x256xf32>
    %482 = vector.shape_cast %479 : vector<4x256xf32> to vector<1x4x256xf32>
    tpu.vector_store %arg9[%c0_90, %c0_91, %c0_92], %482 {strides = array<i32>} : memref<1x4x256xf32, #tpu.memory_space<vmem>>, vector<1x4x256xf32>,
    %483 = vector.extract_strided_slice %474 {offsets = [1, 0], sizes = [1, 256], strides = [1, 1]} : vector<4x256xf32> to vector<1x256xf32>
    %484 = vector.broadcast %61 : vector<4x1xf32> to vector<4x256xf32>
    %485 = vector.broadcast %483 : vector<1x256xf32> to vector<4x256xf32>
    %486 = arith.mulf %484, %485 : vector<4x256xf32>
    %487 = arith.mulf %3, %486 : vector<4x256xf32>
    %c0_93 = arith.constant 0 : index
    %c0_94 = arith.constant 0 : index
    %c0_95 = arith.constant 0 : index
    %488 = vector.load %arg10[%c0_93, %c0_94, %c0_95] : memref<1x4x256xf32, #tpu.memory_space<vmem>>, vector<1x4x256xf32>
    %489 = vector.shape_cast %488 : vector<1x4x256xf32> to vector<4x256xf32>
    %490 = vector.shape_cast %487 : vector<4x256xf32> to vector<1x4x256xf32>
    tpu.vector_store %arg10[%c0_93, %c0_94, %c0_95], %490 {strides = array<i32>} : memref<1x4x256xf32, #tpu.memory_space<vmem>>, vector<1x4x256xf32>,
    %491 = vector.extract_strided_slice %474 {offsets = [2, 0], sizes = [1, 256], strides = [1, 1]} : vector<4x256xf32> to vector<1x256xf32>
    %492 = vector.broadcast %62 : vector<4x1xf32> to vector<4x256xf32>
    %493 = vector.broadcast %491 : vector<1x256xf32> to vector<4x256xf32>
    %494 = arith.mulf %492, %493 : vector<4x256xf32>
    %495 = arith.mulf %5, %494 : vector<4x256xf32>
    %c0_96 = arith.constant 0 : index
    %c0_97 = arith.constant 0 : index
    %c0_98 = arith.constant 0 : index
    %496 = vector.load %arg11[%c0_96, %c0_97, %c0_98] : memref<1x4x256xf32, #tpu.memory_space<vmem>>, vector<1x4x256xf32>
    %497 = vector.shape_cast %496 : vector<1x4x256xf32> to vector<4x256xf32>
    %498 = vector.shape_cast %495 : vector<4x256xf32> to vector<1x4x256xf32>
    tpu.vector_store %arg11[%c0_96, %c0_97, %c0_98], %498 {strides = array<i32>} : memref<1x4x256xf32, #tpu.memory_space<vmem>>, vector<1x4x256xf32>,
    %499 = vector.extract_strided_slice %474 {offsets = [3, 0], sizes = [1, 256], strides = [1, 1]} : vector<4x256xf32> to vector<1x256xf32>
    %500 = vector.broadcast %63 : vector<4x1xf32> to vector<4x256xf32>
    %501 = vector.broadcast %499 : vector<1x256xf32> to vector<4x256xf32>
    %502 = arith.mulf %500, %501 : vector<4x256xf32>
    %503 = arith.mulf %7, %502 : vector<4x256xf32>
    %c0_99 = arith.constant 0 : index
    %c0_100 = arith.constant 0 : index
    %c0_101 = arith.constant 0 : index
    %504 = vector.load %arg12[%c0_99, %c0_100, %c0_101] : memref<1x4x256xf32, #tpu.memory_space<vmem>>, vector<1x4x256xf32>
    %505 = vector.shape_cast %504 : vector<1x4x256xf32> to vector<4x256xf32>
    %506 = vector.shape_cast %503 : vector<4x256xf32> to vector<1x4x256xf32>
    tpu.vector_store %arg12[%c0_99, %c0_100, %c0_101], %506 {strides = array<i32>} : memref<1x4x256xf32, #tpu.memory_space<vmem>>, vector<1x4x256xf32>,
    return
  }
  func.func @transform_0(%arg0: i32) -> (i32, i32, i32) {
    %c0_i32 = arith.constant 0 : i32
    %c0_i32_0 = arith.constant 0 : i32
    %c0_i32_1 = arith.constant 0 : i32
    return %arg0, %c0_i32, %c0_i32_0 : i32, i32, i32
  }
  func.func @transform_1(%arg0: i32) -> (i32, i32, i32) {
    %c0_i32 = arith.constant 0 : i32
    %c0_i32_0 = arith.constant 0 : i32
    %c0_i32_1 = arith.constant 0 : i32
    return %arg0, %c0_i32, %c0_i32_0 : i32, i32, i32
  }
  func.func @transform_2(%arg0: i32) -> (i32, i32, i32) {
    %c0_i32 = arith.constant 0 : i32
    %c0_i32_0 = arith.constant 0 : i32
    %c0_i32_1 = arith.constant 0 : i32
    return %arg0, %c0_i32, %c0_i32_0 : i32, i32, i32
  }
  func.func @transform_3(%arg0: i32) -> (i32, i32, i32) {
    %c0_i32 = arith.constant 0 : i32
    %c0_i32_0 = arith.constant 0 : i32
    %c0_i32_1 = arith.constant 0 : i32
    return %arg0, %c0_i32, %c0_i32_0 : i32, i32, i32
  }
  func.func @transform_4(%arg0: i32) -> (i32, i32) {
    %c0_i32 = arith.constant 0 : i32
    %c0_i32_0 = arith.constant 0 : i32
    %c0_i32_1 = arith.constant 0 : i32
    return %c0_i32, %c0_i32_0 : i32, i32
  }
  func.func @transform_5(%arg0: i32) -> (i32, i32) {
    %c0_i32 = arith.constant 0 : i32
    %c0_i32_0 = arith.constant 0 : i32
    %c0_i32_1 = arith.constant 0 : i32
    return %c0_i32, %c0_i32_0 : i32, i32
  }
  func.func @transform_6(%arg0: i32) -> (i32, i32) {
    %c0_i32 = arith.constant 0 : i32
    %c0_i32_0 = arith.constant 0 : i32
    %c0_i32_1 = arith.constant 0 : i32
    return %c0_i32, %c0_i32_0 : i32, i32
  }
  func.func @transform_7(%arg0: i32) -> i32 {
    %c0_i32 = arith.constant 0 : i32
    %c0_i32_0 = arith.constant 0 : i32
    return %c0_i32 : i32
  }
  func.func @transform_8(%arg0: i32) -> (i32, i32, i32) {
    %c0_i32 = arith.constant 0 : i32
    %c0_i32_0 = arith.constant 0 : i32
    %c0_i32_1 = arith.constant 0 : i32
    return %arg0, %c0_i32, %c0_i32_0 : i32, i32, i32
  }
  func.func @transform_9(%arg0: i32) -> (i32, i32, i32) {
    %c0_i32 = arith.constant 0 : i32
    %c0_i32_0 = arith.constant 0 : i32
    %c0_i32_1 = arith.constant 0 : i32
    return %arg0, %c0_i32, %c0_i32_0 : i32, i32, i32
  }
  func.func @transform_10(%arg0: i32) -> (i32, i32, i32) {
    %c0_i32 = arith.constant 0 : i32
    %c0_i32_0 = arith.constant 0 : i32
    %c0_i32_1 = arith.constant 0 : i32
    return %arg0, %c0_i32, %c0_i32_0 : i32, i32, i32
  }
  func.func @transform_11(%arg0: i32) -> (i32, i32, i32) {
    %c0_i32 = arith.constant 0 : i32
    %c0_i32_0 = arith.constant 0 : i32
    %c0_i32_1 = arith.constant 0 : i32
    return %arg0, %c0_i32, %c0_i32_0 : i32, i32, i32
  }
}

</mosaic_0001>

<llo_original>
// kernel: tpu_custom_call.1
$region0: #{tpu_custom_call.1}
  #allocation0 [shape = 'u32[]', space=smem, size = 0x4, offset = 0x4, fixed_abs, tag = 'smem constant byte address 0x4 - core index']
  #allocation1 [shape = 'u32[72,128]{1,0:T(1,128)}', space=vmem, size = 0x9000, scoped, tag = 'internal scratch']
  %s0 = inlined_call_operand.vmem [shape: f32[2,4,256], index: 0, kind: input, shape index: {}]
  %s1 = inlined_call_operand.vmem [shape: f32[2,4,256], index: 1, kind: input, shape index: {}]
  %s2 = inlined_call_operand.hbm [shape: f32[2,4,256], index: 2, kind: input, shape index: {}]
  %s3 = inlined_call_operand.hbm [shape: f32[2,4,256], index: 3, kind: input, shape index: {}]
  %s4 = inlined_call_operand.vmem [shape: f32[16,1], index: 4, kind: input, shape index: {}]
  %s5 = inlined_call_operand.vmem [shape: f32[16,1], index: 5, kind: input, shape index: {}]
  %s6 = inlined_call_operand.hbm [shape: f32[8,49], index: 6, kind: input, shape index: {}]
  %s7 = inlined_call_operand.vmem [shape: f32[9], index: 7, kind: input, shape index: {}]
  %s8 = inlined_call_operand.hbm [shape: f32[2,4,256], index: 8, kind: output, shape index: {0}]
  %s9 = inlined_call_operand.hbm [shape: f32[2,4,256], index: 9, kind: output, shape index: {1}]
  %s10 = inlined_call_operand.hbm [shape: f32[2,4,256], index: 10, kind: output, shape index: {2}]
  %s11 = inlined_call_operand.hbm [shape: f32[2,4,256], index: 11, kind: output, shape index: {3}]
  %12 = xla_tuple %s8, %s9, %s10, %s11
  %s13 = sld [smem:[#allocation0]]
  $region105: #{tpu_custom_call.1} parent=0
    _
  %s15 = ssub.s32 1, %s13
  %s16 = scalar_select 0, %s15, %s13
  $region1: #{tpu_custom_call.1} parent=0
    #allocation2 [shape = 'u8[8192]{0}', space=vmem, size = 0x2000, scoped, tag = 'input window, operand 2']
    #allocation3 [shape = 's32[2]{0}', space=sflag, size = 0x8, scoped, tag = 'scoped memory for tpu_custom_call.1']
    #allocation4 [shape = 's32[2]{0}', space=sflag, size = 0x8, scoped, tag = 'scoped memory for tpu_custom_call.1']
    #allocation5 [shape = 's32[2]{0}', space=sflag, size = 0x8, scoped, tag = 'scoped memory for tpu_custom_call.1']
    #allocation6 [shape = 'u8[8192]{0}', space=vmem, size = 0x2000, scoped, tag = 'input window, operand 3']
    #allocation7 [shape = 's32[2]{0}', space=sflag, size = 0x8, scoped, tag = 'scoped memory for tpu_custom_call.1']
    #allocation8 [shape = 'u8[4096]{0}', space=vmem, size = 0x1000, scoped, tag = 'input window, operand 6, single buffered']
    #allocation9 [shape = 'u8[512]{0}', space=smem, size = 0x200, scoped, tag = 'input window, operand 7, single buffered']
    #allocation10 [shape = 'u8[8192]{0}', space=vmem, size = 0x2000, scoped, tag = 'output window, operand 0']
    #allocation11 [shape = 'u8[8192]{0}', space=vmem, size = 0x2000, scoped, tag = 'output window, operand 1']
    #allocation12 [shape = 's32[2]{0}', space=sflag, size = 0x8, scoped, tag = 'scoped memory for tpu_custom_call.1']
    #allocation13 [shape = 'u8[8192]{0}', space=vmem, size = 0x2000, scoped, tag = 'output window, operand 2']
    #allocation14 [shape = 'u8[8192]{0}', space=vmem, size = 0x2000, scoped, tag = 'output window, operand 3']
    #allocation15 [shape = 's32[2]{0}', space=sflag, size = 0x8, scoped, tag = 'scoped memory for tpu_custom_call.1']
    %17 = vsyncpa [#allocation3], 0
    %s18 = scalar_lea.sflag [#allocation3], 1
    %19 = vsyncpa %s18, 0
    %20 = vsyncpa [#allocation7], 0
    %s21 = scalar_lea.sflag [#allocation7], 1
    %22 = vsyncpa %s21, 0
    %23 = vsyncpa [#allocation5], 0
    %24 = vsyncpa [#allocation4], 0
    %s25 = scalar_lea.sflag [#allocation4], 1
    %26 = vsyncpa %s25, 0
    %27 = vsyncpa [#allocation12], 0
    %s28 = scalar_lea.sflag [#allocation12], 1
    %29 = vsyncpa %s28, 0
    %30 = vsyncpa [#allocation15], 0
    %s31 = scalar_lea.sflag [#allocation15], 1
    %32 = vsyncpa %s31, 0
    loop: start=0, step=1, limit=4
    $region2: #{tpu_custom_call.1} parent=1 // loop_pre_header
      _
    $region3: #{tpu_custom_call.1} parent=1 // loop_header
      %s34 = sphi 0, %s38
      %p35 = scmp.ge.s32.totalorder %s34, 4
      %s44 = sphi 0, %s46
      %s47 = sphi 0, %s44
      %s48 = sphi 0, %s47
      %s64 = sphi 0, %s48
      %s70 = sphi 0, %s72
      %s73 = sphi 0, %s70
      %s74 = sphi 0, %s73
      %s90 = sphi 0, %s74
      %s96 = sphi 0, %s98
      %s99 = sphi 0, %s96
      %s100 = sphi 0, %s99
      %s116 = sphi 0, %s100
      %s122 = sphi 0, %s124
      %s125 = sphi 0, %s122
      %s126 = sphi 0, %s125
      %s142 = sphi 0, %s126
      %s146 = sphi 0, %s146
      %s148 = sphi 0, %s146
      %s149 = sphi 0, %s148
      %s163 = sphi 0, %s149
      %s167 = sphi 0, %s167
      %s169 = sphi 0, %s167
      %s170 = sphi 0, %s169
      %s184 = sphi 0, %s170
      %s188 = sphi 0, %s188
      %s190 = sphi 0, %s188
      %s191 = sphi 0, %s190
      %s205 = sphi 0, %s191
      %s209 = sphi 0, %s209
      %s211 = sphi 0, %s209
      %s212 = sphi 0, %s211
      %s226 = sphi 0, %s212
      %s232 = sphi 0, %s234
      %s235 = sphi 0, %s232
      %s236 = sphi 0, %s235
      %s252 = sphi 0, %s236
      %s258 = sphi 0, %s260
      %s261 = sphi 0, %s258
      %s262 = sphi 0, %s261
      %s278 = sphi 0, %s262
      %s284 = sphi 0, %s286
      %s287 = sphi 0, %s284
      %s288 = sphi 0, %s287
      %s304 = sphi 0, %s288
      %s310 = sphi 0, %s312
      %s313 = sphi 0, %s310
      %s314 = sphi 0, %s313
      %s330 = sphi 0, %s314
    $region4: #{tpu_custom_call.1} parent=1 // loop_header_branch
      %37 = sbr.rel (%p35) target = $region8
    $region5: #{tpu_custom_call.1} parent=1 // loop_body
      %s39 = ssub.s32 %s34, 1
      %s40 = ssub.s32 %s34, 2
      %s41 = sadd.s32 %s34, 1
      %s42 = ssub.s32 %s34, %s41
      %p43 = scmp.eq.s32.totalorder %s42, 0
      %s45 = sadd.s32 %s44, 1
      %s46 = scalar_select %p43, %s44, %s45
      %p49 = pneg %p43
      %p50 = scmp.eq.s32.totalorder %s34, 1
      %p51 = por %p49, %p50
      %p52 = scmp.ne.s32.totalorder %s44, %s47
      %p53 = scmp.eq.s32.totalorder %s34, 0
      %p54 = por %p52, %p53
      %p55 = scmp.ne.s32.totalorder %s44, %s47
      %p56 = scmp.eq.s32.totalorder %s39, 1
      %p57 = por %p55, %p56
      %p58 = scmp.ne.s32.totalorder %s47, %s48
      %p59 = scmp.eq.s32.totalorder %s39, 0
      %p60 = por %p58, %p59
      %p61 = scmp.ne.s32.totalorder %s47, %s48
      %p62 = scmp.eq.s32.totalorder %s40, 1
      %p63 = por %p61, %p62
      %p65 = scmp.ne.s32.totalorder %s48, %s64
      %p66 = scmp.eq.s32.totalorder %s40, 0
      %p67 = por %p65, %p66
      %s68 = ssub.s32 %s34, %s41
      %p69 = scmp.eq.s32.totalorder %s68, 0
      %s71 = sadd.s32 %s70, 1
      %s72 = scalar_select %p69, %s70, %s71
      %p75 = pneg %p69
      %p76 = scmp.eq.s32.totalorder %s34, 1
      %p77 = por %p75, %p76
      %p78 = scmp.ne.s32.totalorder %s70, %s73
      %p79 = scmp.eq.s32.totalorder %s34, 0
      %p80 = por %p78, %p79
      %p81 = scmp.ne.s32.totalorder %s70, %s73
      %p82 = scmp.eq.s32.totalorder %s39, 1
      %p83 = por %p81, %p82
      %p84 = scmp.ne.s32.totalorder %s73, %s74
      %p85 = scmp.eq.s32.totalorder %s39, 0
      %p86 = por %p84, %p85
      %p87 = scmp.ne.s32.totalorder %s73, %s74
      %p88 = scmp.eq.s32.totalorder %s40, 1
      %p89 = por %p87, %p88
      %p91 = scmp.ne.s32.totalorder %s74, %s90
      %p92 = scmp.eq.s32.totalorder %s40, 0
      %p93 = por %p91, %p92
      %s94 = ssub.s32 %s34, %s41
      %p95 = scmp.eq.s32.totalorder %s94, 0
      %s97 = sadd.s32 %s96, 1
      %s98 = scalar_select %p95, %s96, %s97
      %p101 = pneg %p95
      %p102 = scmp.eq.s32.totalorder %s34, 1
      %p103 = por %p101, %p102
      %p104 = scmp.ne.s32.totalorder %s96, %s99
      %p105 = scmp.eq.s32.totalorder %s34, 0
      %p106 = por %p104, %p105
      %p107 = scmp.ne.s32.totalorder %s96, %s99
      %p108 = scmp.eq.s32.totalorder %s39, 1
      %p109 = por %p107, %p108
      %p110 = scmp.ne.s32.totalorder %s99, %s100
      %p111 = scmp.eq.s32.totalorder %s39, 0
      %p112 = por %p110, %p111
      %p113 = scmp.ne.s32.totalorder %s99, %s100
      %p114 = scmp.eq.s32.totalorder %s40, 1
      %p115 = por %p113, %p114
      %p117 = scmp.ne.s32.totalorder %s100, %s116
      %p118 = scmp.eq.s32.totalorder %s40, 0
      %p119 = por %p117, %p118
      %s120 = ssub.s32 %s34, %s41
      %p121 = scmp.eq.s32.totalorder %s120, 0
      %s123 = sadd.s32 %s122, 1
      %s124 = scalar_select %p121, %s122, %s123
      %p127 = pneg %p121
      %p128 = scmp.eq.s32.totalorder %s34, 1
      %p129 = por %p127, %p128
      %p130 = scmp.ne.s32.totalorder %s122, %s125
      %p131 = scmp.eq.s32.totalorder %s34, 0
      %p132 = por %p130, %p131
      %p133 = scmp.ne.s32.totalorder %s122, %s125
      %p134 = scmp.eq.s32.totalorder %s39, 1
      %p135 = por %p133, %p134
      %p136 = scmp.ne.s32.totalorder %s125, %s126
      %p137 = scmp.eq.s32.totalorder %s39, 0
      %p138 = por %p136, %p137
      %p139 = scmp.ne.s32.totalorder %s125, %s126
      %p140 = scmp.eq.s32.totalorder %s40, 1
      %p141 = por %p139, %p140
      %p143 = scmp.ne.s32.totalorder %s126, %s142
      %p144 = scmp.eq.s32.totalorder %s40, 0
      %p145 = por %p143, %p144
      %s147 = sadd.s32 %s146, 1
      %p150 = scmp.eq.s32.totalorder %s34, 1
      %p151 = scmp.ne.s32.totalorder %s146, %s148
      %p152 = scmp.eq.s32.totalorder %s34, 0
      %p153 = por %p151, %p152
      %p154 = scmp.ne.s32.totalorder %s146, %s148
      %p155 = scmp.eq.s32.totalorder %s39, 1
      %p156 = por %p154, %p155
      %p157 = scmp.ne.s32.totalorder %s148, %s149
      %p158 = scmp.eq.s32.totalorder %s39, 0
      %p159 = por %p157, %p158
      %p160 = scmp.ne.s32.totalorder %s148, %s149
      %p161 = scmp.eq.s32.totalorder %s40, 1
      %p162 = por %p160, %p161
      %p164 = scmp.ne.s32.totalorder %s149, %s163
      %p165 = scmp.eq.s32.totalorder %s40, 0
      %p166 = por %p164, %p165
      %s168 = sadd.s32 %s167, 1
      %p171 = scmp.eq.s32.totalorder %s34, 1
      %p172 = scmp.ne.s32.totalorder %s167, %s169
      %p173 = scmp.eq.s32.totalorder %s34, 0
      %p174 = por %p172, %p173
      %p175 = scmp.ne.s32.totalorder %s167, %s169
      %p176 = scmp.eq.s32.totalorder %s39, 1
      %p177 = por %p175, %p176
      %p178 = scmp.ne.s32.totalorder %s169, %s170
      %p179 = scmp.eq.s32.totalorder %s39, 0
      %p180 = por %p178, %p179
      %p181 = scmp.ne.s32.totalorder %s169, %s170
      %p182 = scmp.eq.s32.totalorder %s40, 1
      %p183 = por %p181, %p182
      %p185 = scmp.ne.s32.totalorder %s170, %s184
      %p186 = scmp.eq.s32.totalorder %s40, 0
      %p187 = por %p185, %p186
      %s189 = sadd.s32 %s188, 1
      %p192 = scmp.eq.s32.totalorder %s34, 1
      %p193 = scmp.ne.s32.totalorder %s188, %s190
      %p194 = scmp.eq.s32.totalorder %s34, 0
      %p195 = por %p193, %p194
      %p196 = scmp.ne.s32.totalorder %s188, %s190
      %p197 = scmp.eq.s32.totalorder %s39, 1
      %p198 = por %p196, %p197
      %p199 = scmp.ne.s32.totalorder %s190, %s191
      %p200 = scmp.eq.s32.totalorder %s39, 0
      %p201 = por %p199, %p200
      %p202 = scmp.ne.s32.totalorder %s190, %s191
      %p203 = scmp.eq.s32.totalorder %s40, 1
      %p204 = por %p202, %p203
      %p206 = scmp.ne.s32.totalorder %s191, %s205
      %p207 = scmp.eq.s32.totalorder %s40, 0
      %p208 = por %p206, %p207
      %s210 = sadd.s32 %s209, 1
      %p213 = scmp.eq.s32.totalorder %s34, 1
      %p214 = scmp.ne.s32.totalorder %s209, %s211
      %p215 = scmp.eq.s32.totalorder %s34, 0
      %p216 = por %p214, %p215
      %p217 = scmp.ne.s32.totalorder %s209, %s211
      %p218 = scmp.eq.s32.totalorder %s39, 1
      %p219 = por %p217, %p218
      %p220 = scmp.ne.s32.totalorder %s211, %s212
      %p221 = scmp.eq.s32.totalorder %s39, 0
      %p222 = por %p220, %p221
      %p223 = scmp.ne.s32.totalorder %s211, %s212
      %p224 = scmp.eq.s32.totalorder %s40, 1
      %p225 = por %p223, %p224
      %p227 = scmp.ne.s32.totalorder %s212, %s226
      %p228 = scmp.eq.s32.totalorder %s40, 0
      %p229 = por %p227, %p228
      %s230 = ssub.s32 %s34, %s41
      %p231 = scmp.eq.s32.totalorder %s230, 0
      %s233 = sadd.s32 %s232, 1
      %s234 = scalar_select %p231, %s232, %s233
      %p237 = pneg %p231
      %p238 = scmp.eq.s32.totalorder %s34, 1
      %p239 = por %p237, %p238
      %p240 = scmp.ne.s32.totalorder %s232, %s235
      %p241 = scmp.eq.s32.totalorder %s34, 0
      %p242 = por %p240, %p241
      %p243 = scmp.ne.s32.totalorder %s232, %s235
      %p244 = scmp.eq.s32.totalorder %s39, 1
      %p245 = por %p243, %p244
      %p246 = scmp.ne.s32.totalorder %s235, %s236
      %p247 = scmp.eq.s32.totalorder %s39, 0
      %p248 = por %p246, %p247
      %p249 = scmp.ne.s32.totalorder %s235, %s236
      %p250 = scmp.eq.s32.totalorder %s40, 1
      %p251 = por %p249, %p250
      %p253 = scmp.ne.s32.totalorder %s236, %s252
      %p254 = scmp.eq.s32.totalorder %s40, 0
      %p255 = por %p253, %p254
      %s256 = ssub.s32 %s34, %s41
      %p257 = scmp.eq.s32.totalorder %s256, 0
      %s259 = sadd.s32 %s258, 1
      %s260 = scalar_select %p257, %s258, %s259
      %p263 = pneg %p257
      %p264 = scmp.eq.s32.totalorder %s34, 1
      %p265 = por %p263, %p264
      %p266 = scmp.ne.s32.totalorder %s258, %s261
      %p267 = scmp.eq.s32.totalorder %s34, 0
      %p268 = por %p266, %p267
      %p269 = scmp.ne.s32.totalorder %s258, %s261
      %p270 = scmp.eq.s32.totalorder %s39, 1
      %p271 = por %p269, %p270
      %p272 = scmp.ne.s32.totalorder %s261, %s262
      %p273 = scmp.eq.s32.totalorder %s39, 0
      %p274 = por %p272, %p273
      %p275 = scmp.ne.s32.totalorder %s261, %s262
      %p276 = scmp.eq.s32.totalorder %s40, 1
      %p277 = por %p275, %p276
      %p279 = scmp.ne.s32.totalorder %s262, %s278
      %p280 = scmp.eq.s32.totalorder %s40, 0
      %p281 = por %p279, %p280
      %s282 = ssub.s32 %s34, %s41
      %p283 = scmp.eq.s32.totalorder %s282, 0
      %s285 = sadd.s32 %s284, 1
      %s286 = scalar_select %p283, %s284, %s285
      %p289 = pneg %p283
      %p290 = scmp.eq.s32.totalorder %s34, 1
      %p291 = por %p289, %p290
      %p292 = scmp.ne.s32.totalorder %s284, %s287
      %p293 = scmp.eq.s32.totalorder %s34, 0
      %p294 = por %p292, %p293
      %p295 = scmp.ne.s32.totalorder %s284, %s287
      %p296 = scmp.eq.s32.totalorder %s39, 1
      %p297 = por %p295, %p296
      %p298 = scmp.ne.s32.totalorder %s287, %s288
      %p299 = scmp.eq.s32.totalorder %s39, 0
      %p300 = por %p298, %p299
      %p301 = scmp.ne.s32.totalorder %s287, %s288
      %p302 = scmp.eq.s32.totalorder %s40, 1
      %p303 = por %p301, %p302
      %p305 = scmp.ne.s32.totalorder %s288, %s304
      %p306 = scmp.eq.s32.totalorder %s40, 0
      %p307 = por %p305, %p306
      %s308 = ssub.s32 %s34, %s41
      %p309 = scmp.eq.s32.totalorder %s308, 0
      %s311 = sadd.s32 %s310, 1
      %s312 = scalar_select %p309, %s310, %s311
      %p315 = pneg %p309
      %p316 = scmp.eq.s32.totalorder %s34, 1
      %p317 = por %p315, %p316
      %p318 = scmp.ne.s32.totalorder %s310, %s313
      %p319 = scmp.eq.s32.totalorder %s34, 0
      %p320 = por %p318, %p319
      %p321 = scmp.ne.s32.totalorder %s310, %s313
      %p322 = scmp.eq.s32.totalorder %s39, 1
      %p323 = por %p321, %p322
      %p324 = scmp.ne.s32.totalorder %s313, %s314
      %p325 = scmp.eq.s32.totalorder %s39, 0
      %p326 = por %p324, %p325
      %p327 = scmp.ne.s32.totalorder %s313, %s314
      %p328 = scmp.eq.s32.totalorder %s40, 1
      %p329 = por %p327, %p328
      %p331 = scmp.ne.s32.totalorder %s314, %s330
      %p332 = scmp.eq.s32.totalorder %s40, 0
      %p333 = por %p331, %p332
      %p334 = scmp.le.s32.totalorder 1, %s34
      %p335 = scmp.lt.s32.totalorder %s34, 3
      %p336 = pnand %p334, %p335
      %p337 = pneg %p336
      // Predicated region
      $region9: #{tpu_custom_call.1} parent=5 // pred_check
        _
      $region10: #{tpu_custom_call.1} parent=5 // pred_check_branch
        %339 = sbr.rel (%p336) target = $region12
      $region11: #{tpu_custom_call.1} parent=5 // pred_region
        %s340 = ssub.s32 %s34, 1
        // Predicated region
        $region13: #{tpu_custom_call.1} parent=11 // pred_check
          %p341 = pneg %p159
        $region14: #{tpu_custom_call.1} parent=11 // pred_check_branch
          %343 = sbr.rel (%p341) target = $region16
        $region15: #{tpu_custom_call.1} parent=11 // pred_region
          _
        $region16: #{tpu_custom_call.1} parent=11 // pred_fallthru
          _
        // Predicated region
        $region17: #{tpu_custom_call.1} parent=11 // pred_check
          %p344 = pneg %p180
        $region18: #{tpu_custom_call.1} parent=11 // pred_check_branch
          %346 = sbr.rel (%p344) target = $region20
        $region19: #{tpu_custom_call.1} parent=11 // pred_region
          _
        $region20: #{tpu_custom_call.1} parent=11 // pred_fallthru
          _
        // Predicated region
        $region21: #{tpu_custom_call.1} parent=11 // pred_check
          %p347 = pneg %p201
        $region22: #{tpu_custom_call.1} parent=11 // pred_check_branch
          %349 = sbr.rel (%p347) target = $region24
        $region23: #{tpu_custom_call.1} parent=11 // pred_region
          %351 = vsyncadd [#allocation7], 0
          %s353 = sshll.u32 %s6, 4
          %s354 = int_to_ptr.hbm [resolvable:$true] %s353
          %s355 = sshll.u32 [#allocation8], 4
          %s356 = int_to_ptr.vmem [resolvable:$true] %s355
          %358 = dma.hbm_to_vmem [thread:$0]  %s354, 128, %s356, [#allocation7]
        $region24: #{tpu_custom_call.1} parent=11 // pred_fallthru
          _
        // Predicated region
        $region25: #{tpu_custom_call.1} parent=11 // pred_check
          %p359 = pneg %p222
        $region26: #{tpu_custom_call.1} parent=11 // pred_check_branch
          %361 = sbr.rel (%p359) target = $region28
        $region27: #{tpu_custom_call.1} parent=11 // pred_region
          %363 = vsyncadd [#allocation5], 0
          %s365 = sshll.u32 %s7, 4
          %s366 = int_to_ptr.vmem [resolvable:$true] %s365
          %368 = dma.vmem_to_smem %s366, 16, [#allocation9], [#allocation5]
        $region28: #{tpu_custom_call.1} parent=11 // pred_fallthru
          _
      $region12: #{tpu_custom_call.1} parent=5 // pred_fallthru
        _
      %p369 = scmp.lt.s32.totalorder %s34, 2
      // Predicated region
      $region29: #{tpu_custom_call.1} parent=5 // pred_check
        %p370 = pneg %p369
      $region30: #{tpu_custom_call.1} parent=5 // pred_check_branch
        %372 = sbr.rel (%p370) target = $region32
      $region31: #{tpu_custom_call.1} parent=5 // pred_region
        // Predicated region
        $region33: #{tpu_custom_call.1} parent=31 // pred_check
          %p373 = pneg %p54
        $region34: #{tpu_custom_call.1} parent=31 // pred_check_branch
          %375 = sbr.rel (%p373) target = $region36
        $region35: #{tpu_custom_call.1} parent=31 // pred_region
          %p376 = scmp.lt.s32.totalorder %s34, 1
          %s377 = scalar_select %p376, %s34, 1
          %s378 = smul.addr %s377, 2
          %s379 = smul.addr %s378, 4
          %s380 = scalar_lea.vmem %s0, %s379
        $region36: #{tpu_custom_call.1} parent=31 // pred_fallthru
          _
        // Predicated region
        $region37: #{tpu_custom_call.1} parent=31 // pred_check
          %p381 = pneg %p80
        $region38: #{tpu_custom_call.1} parent=31 // pred_check_branch
          %383 = sbr.rel (%p381) target = $region40
        $region39: #{tpu_custom_call.1} parent=31 // pred_region
          %p384 = scmp.lt.s32.totalorder %s34, 1
          %s385 = scalar_select %p384, %s34, 1
          %s386 = smul.addr %s385, 2
          %s387 = smul.addr %s386, 4
          %s388 = scalar_lea.vmem %s1, %s387
        $region40: #{tpu_custom_call.1} parent=31 // pred_fallthru
          _
        // Predicated region
        $region41: #{tpu_custom_call.1} parent=31 // pred_check
          %p389 = pneg %p106
        $region42: #{tpu_custom_call.1} parent=31 // pred_check_branch
          %391 = sbr.rel (%p389) target = $region44
        $region43: #{tpu_custom_call.1} parent=31 // pred_region
          %s392 = sand.u32 %s96, 1
          %s393 = scalar_lea.sflag [#allocation3], %s392
          %s394 = sand.u32 %s96, 1
          %s395 = smul.addr %s394, 8
          %s396 = scalar_lea.vmem [#allocation2], %s395
          %398 = vsyncadd %s393, 0
          %s399 = smul.addr %s34, 2
          %s400 = smul.addr %s399, 4
          %s401 = scalar_lea.hbm %s2, %s400
          %s403 = sshll.u32 %s401, 4
          %s404 = int_to_ptr.hbm [resolvable:$true] %s403
          %s405 = sshll.u32 %s396, 4
          %s406 = int_to_ptr.vmem [resolvable:$true] %s405
          %408 = dma.hbm_to_vmem [thread:$0]  %s404, 128, %s406, %s393
        $region44: #{tpu_custom_call.1} parent=31 // pred_fallthru
          _
        // Predicated region
        $region45: #{tpu_custom_call.1} parent=31 // pred_check
          %p409 = pneg %p132
        $region46: #{tpu_custom_call.1} parent=31 // pred_check_branch
          %411 = sbr.rel (%p409) target = $region48
        $region47: #{tpu_custom_call.1} parent=31 // pred_region
          %s412 = sand.u32 %s34, 1
          %s413 = scalar_lea.sflag [#allocation7], %s412
          %s414 = sand.u32 %s122, 1
          %s415 = smul.addr %s414, 8
          %s416 = scalar_lea.vmem [#allocation6], %s415
          %418 = vsyncadd %s413, 0
          %s419 = smul.addr %s34, 2
          %s420 = smul.addr %s419, 4
          %s421 = scalar_lea.hbm %s3, %s420
          %s423 = sshll.u32 %s421, 4
          %s424 = int_to_ptr.hbm [resolvable:$true] %s423
          %s425 = sshll.u32 %s416, 4
          %s426 = int_to_ptr.vmem [resolvable:$true] %s425
          %428 = dma.hbm_to_vmem [thread:$0]  %s424, 128, %s426, %s413
        $region48: #{tpu_custom_call.1} parent=31 // pred_fallthru
          _
      $region32: #{tpu_custom_call.1} parent=5 // pred_fallthru
        _
      %p429 = scmp.le.s32.totalorder 1, %s34
      %p430 = scmp.lt.s32.totalorder %s34, 3
      %p431 = pnand %p429, %p430
      %p432 = pneg %p431
      // Predicated region
      $region49: #{tpu_custom_call.1} parent=5 // pred_check
        _
      $region50: #{tpu_custom_call.1} parent=5 // pred_check_branch
        %434 = sbr.rel (%p431) target = $region52
      $region51: #{tpu_custom_call.1} parent=5 // pred_region
        %s435 = ssub.s32 %s34, 1
        %s436 = sand.u32 %s99, 1
        %s437 = scalar_lea.sflag [#allocation3], %s436
        %s438 = sand.u32 %s99, 1
        %s439 = smul.addr %s438, 8
        %s440 = scalar_lea.vmem [#allocation2], %s439
        // Predicated region
        $region53: #{tpu_custom_call.1} parent=51 // pred_check
          %p441 = pneg %p112
        $region54: #{tpu_custom_call.1} parent=51 // pred_check_branch
          %443 = sbr.rel (%p441) target = $region56
        $region55: #{tpu_custom_call.1} parent=51 // pred_region
          %445 = dma.done %s437, 128
        $region56: #{tpu_custom_call.1} parent=51 // pred_fallthru
          _
        %s446 = sand.u32 %s39, 1
        %s447 = scalar_lea.sflag [#allocation7], %s446
        %s448 = sand.u32 %s125, 1
        %s449 = smul.addr %s448, 8
        %s450 = scalar_lea.vmem [#allocation6], %s449
        // Predicated region
        $region57: #{tpu_custom_call.1} parent=51 // pred_check
          %p451 = pneg %p138
        $region58: #{tpu_custom_call.1} parent=51 // pred_check_branch
          %453 = sbr.rel (%p451) target = $region60
        $region59: #{tpu_custom_call.1} parent=51 // pred_region
          %455 = dma.done %s447, 128
        $region60: #{tpu_custom_call.1} parent=51 // pred_fallthru
          _
        // Predicated region
        $region61: #{tpu_custom_call.1} parent=51 // pred_check
          %p456 = pneg %p201
        $region62: #{tpu_custom_call.1} parent=51 // pred_check_branch
          %458 = sbr.rel (%p456) target = $region64
        $region63: #{tpu_custom_call.1} parent=51 // pred_region
          %460 = dma.done [#allocation7], 128
        $region64: #{tpu_custom_call.1} parent=51 // pred_fallthru
          _
        // Predicated region
        $region65: #{tpu_custom_call.1} parent=51 // pred_check
          %p461 = pneg %p222
        $region66: #{tpu_custom_call.1} parent=51 // pred_check_branch
          %463 = sbr.rel (%p461) target = $region68
        $region67: #{tpu_custom_call.1} parent=51 // pred_region
          %465 = dma.done [#allocation5], 16
        $region68: #{tpu_custom_call.1} parent=51 // pred_fallthru
          _
        %466 = sfence
        %p467 = scmp.lt.s32.totalorder %s39, 1
        %s468 = scalar_select %p467, %s39, 1
        %s469 = smul.addr %s468, 2
        %s470 = smul.addr %s469, 4
        %s471 = scalar_lea.vmem %s0, %s470
        %p472 = pneg %p60
        %p473 = pneg %p57
        %p474 = scmp.lt.s32.totalorder %s39, 1
        %s475 = scalar_select %p474, %s39, 1
        %s476 = smul.addr %s475, 2
        %s477 = smul.addr %s476, 4
        %s478 = scalar_lea.vmem %s1, %s477
        %p479 = pneg %p86
        %p480 = pneg %p83
        %s481 = sand.u32 %s99, 1
        %s482 = scalar_lea.sflag [#allocation3], %s481
        %s483 = sand.u32 %s99, 1
        %s484 = smul.addr %s483, 8
        %s485 = scalar_lea.vmem [#allocation2], %s484
        %p486 = pneg %p112
        %p487 = pneg %p109
        %s488 = sand.u32 %s39, 1
        %s489 = scalar_lea.sflag [#allocation7], %s488
        %s490 = sand.u32 %s125, 1
        %s491 = smul.addr %s490, 8
        %s492 = scalar_lea.vmem [#allocation6], %s491
        %p493 = pneg %p138
        %p494 = pneg %p135
        %p495 = pneg %p159
        %p496 = pneg %p156
        %p497 = pneg %p180
        %p498 = pneg %p177
        %p499 = pneg %p201
        %p500 = pneg %p198
        %p501 = pneg %p222
        %p502 = pneg %p219
        %p503 = pneg %p248
        %p504 = pneg %p245
        %s505 = sand.u32 %s235, 1
        %s506 = scalar_lea.sflag [#allocation4], %s505
        %s507 = sand.u32 %s235, 1
        %s508 = smul.addr %s507, 8
        %s509 = scalar_lea.vmem [#allocation10], %s508
        %p510 = pneg %p274
        %p511 = pneg %p271
        %s512 = sand.u32 %s39, 1
        %s513 = scalar_lea.sflag [#allocation12], %s512
        %s514 = sand.u32 %s261, 1
        %s515 = smul.addr %s514, 8
        %s516 = scalar_lea.vmem [#allocation11], %s515
        %p517 = pneg %p300
        %p518 = pneg %p297
        %s519 = sand.u32 %s39, 1
        %s520 = scalar_lea.sflag [#allocation12], %s519
        %s521 = sand.u32 %s287, 1
        %s522 = smul.addr %s521, 8
        %s523 = scalar_lea.vmem [#allocation13], %s522
        %p524 = pneg %p326
        %p525 = pneg %p323
        %s526 = sand.u32 %s313, 1
        %s527 = scalar_lea.sflag [#allocation15], %s526
        %s528 = sand.u32 %s313, 1
        %s529 = smul.addr %s528, 8
        %s530 = scalar_lea.vmem [#allocation14], %s529
        %p531 = scmp.lt.s32.totalorder %s39, 1
        %s532 = scalar_select %p531, %s39, 1
        %s533 = smul.addr %s532, 2
        %s534 = smul.addr %s533, 4
        %s535 = scalar_lea.vmem %s0, %s534
        %p536 = scmp.lt.s32.totalorder %s39, 1
        %s537 = scalar_select %p536, %s39, 1
        %s538 = smul.addr %s537, 2
        %s539 = smul.addr %s538, 4
        %s540 = scalar_lea.vmem %s1, %s539
        %v541 = vld [vmem:[%s535] sm:$0xff]
        %v542 = vld [vmem:[%s540] sm:$0xff]
        %v543 = vld [vmem:[%s440] sm:$0xff]
        %v544 = vld [vmem:[%s450] sm:$0xff]
        %546 = vst [vmem:[#allocation1] ss:$2 sm:$0xff] %v541
        %v547 = vld.sshfl [vmem:[#allocation1] sm:$0xff pattern:$0x75316420]
        %v548 = vld.sshfl [vmem:[#allocation1 + $0x8] sm:$0xff pattern:$0x75316420]
        %vm551 = vcmask 1043456
        %v552 = vsel %vm551, %v547, 0.0
        %v553 = vsel %vm551, %v548, 0.0
        %v554 = vadd.f32 %v552, %v553
        %555 = vadd.xlane.f32.xlu0 %v554
        %v556 = vpop.xlane.xlu0 %555
        %v557 = vrcp.pop 256.0
        %v558 = vmul.f32 256.0, %v557
        %v559 = vsub.f32 1.0, %v558
        %v560 = vmul.f32 %v557, %v559
        %v561 = vadd.f32 %v557, %v560
        %vm562 = vweird.f32 %v557
        %v563 = vsel %vm562, %v557, %v561
        %v564 = vmul.f32 %v556, %v563
        %566 = vst [vmem:[#allocation1] ss:$2 sm:$0xff] %v542
        %v567 = vld.sshfl [vmem:[#allocation1] sm:$0xff pattern:$0x75316420]
        %v568 = vld.sshfl [vmem:[#allocation1 + $0x8] sm:$0xff pattern:$0x75316420]
        %v571 = vsel %vm551, %v567, 0.0
        %v572 = vsel %vm551, %v568, 0.0
        %v573 = vadd.f32 %v571, %v572
        %574 = vadd.xlane.f32.xlu0 %v573
        %v575 = vpop.xlane.xlu0 %574
        %v576 = vmul.f32 %v575, %v563
        %578 = vst [vmem:[#allocation1] ss:$2 sm:$0xff] %v543
        %v579 = vld.sshfl [vmem:[#allocation1] sm:$0xff pattern:$0x75316420]
        %v580 = vld.sshfl [vmem:[#allocation1 + $0x8] sm:$0xff pattern:$0x75316420]
        %v583 = vsel %vm551, %v579, 0.0
        %v584 = vsel %vm551, %v580, 0.0
        %v585 = vadd.f32 %v583, %v584
        %586 = vadd.xlane.f32.xlu0 %v585
        %v587 = vpop.xlane.xlu0 %586
        %v588 = vmul.f32 %v587, %v563
        %590 = vst [vmem:[#allocation1] ss:$2 sm:$0xff] %v544
        %v591 = vld.sshfl [vmem:[#allocation1] sm:$0xff pattern:$0x75316420]
        %v592 = vld.sshfl [vmem:[#allocation1 + $0x8] sm:$0xff pattern:$0x75316420]
        %v595 = vsel %vm551, %v591, 0.0
        %v596 = vsel %vm551, %v592, 0.0
        %v597 = vadd.f32 %v595, %v596
        %598 = vadd.xlane.f32.xlu0 %v597
        %v599 = vpop.xlane.xlu0 %598
        %v600 = vmul.f32 %v599, %v563
        %v602 = vrot.slane %v576, 4
        %v605 = vrot.slane %v600, 4
        %v607 = vsel %vm551, %v564, %v602
        %v608 = vsel %vm551, %v588, %v605
        %609 = vst [vmem:[#allocation1] ss:$2 sm:$0xff] %v541
        %v610 = vld.sshfl [vmem:[#allocation1] sm:$0xff pattern:$0x75316420]
        %v611 = vld.sshfl [vmem:[#allocation1 + $0x8] sm:$0xff pattern:$0x75316420]
        %v614 = vsel %vm551, %v610, -inf
        %v615 = vsel %vm551, %v611, -inf
        %v616 = vmax.f32 %v614, %v615
        %617 = vmax.xlane.f32.xlu0 %v616
        %v618 = vpop.xlane.xlu0 %617
        %619 = vst [vmem:[#allocation1] ss:$2 sm:$0xff] %v542
        %v620 = vld.sshfl [vmem:[#allocation1] sm:$0xff pattern:$0x75316420]
        %v621 = vld.sshfl [vmem:[#allocation1 + $0x8] sm:$0xff pattern:$0x75316420]
        %v624 = vsel %vm551, %v620, -inf
        %v625 = vsel %vm551, %v621, -inf
        %v626 = vmax.f32 %v624, %v625
        %627 = vmax.xlane.f32.xlu0 %v626
        %v628 = vpop.xlane.xlu0 %627
        %629 = vst [vmem:[#allocation1] ss:$2 sm:$0xff] %v543
        %v630 = vld.sshfl [vmem:[#allocation1] sm:$0xff pattern:$0x75316420]
        %v631 = vld.sshfl [vmem:[#allocation1 + $0x8] sm:$0xff pattern:$0x75316420]
        %v634 = vsel %vm551, %v630, -inf
        %v635 = vsel %vm551, %v631, -inf
        %v636 = vmax.f32 %v634, %v635
        %637 = vmax.xlane.f32.xlu0 %v636
        %v638 = vpop.xlane.xlu0 %637
        %639 = vst [vmem:[#allocation1] ss:$2 sm:$0xff] %v544
        %v640 = vld.sshfl [vmem:[#allocation1] sm:$0xff pattern:$0x75316420]
        %v641 = vld.sshfl [vmem:[#allocation1 + $0x8] sm:$0xff pattern:$0x75316420]
        %v644 = vsel %vm551, %v640, -inf
        %v645 = vsel %vm551, %v641, -inf
        %v646 = vmax.f32 %v644, %v645
        %647 = vmax.xlane.f32.xlu0 %v646
        %v648 = vpop.xlane.xlu0 %647
        %v650 = vrot.slane %v628, 4
        %v653 = vrot.slane %v648, 4
        %v655 = vsel %vm551, %v618, %v650
        %v656 = vsel %vm551, %v638, %v653
        %v657 = vld [vmem:[%s4] sm:$0xff]
        %v658 = vld [vmem:[%s4 + $0x8] sm:$0xff]
        %v659 = vld [vmem:[%s5] sm:$0xff]
        %v660 = vld [vmem:[%s5 + $0x8] sm:$0xff]
        %v661 = vmul.f32 %v657, %v607
        %v662 = vmul.f32 %v658, %v608
        %vm663 = vcmask 7168
        %v664 = vsel %vm663, %v661, 0.0
        %v665 = vsel %vm663, %v662, 0.0
        %v666 = vadd.f32 %v664, %v665
        %v667 = vrot.slane %v666, 4
        %v668 = vadd.f32 %v666, %v667
        %v669 = vrot.slane %v668, 2
        %v670 = vadd.f32 %v668, %v669
        %v671 = vrot.slane %v670, 1
        %v672 = vadd.f32 %v670, %v671
        %v673 = vmax.f32 %v672, 0.0
        %v674 = vmul.f32 %v659, %v673
        %v675 = vmul.f32 %v660, %v673
        %v676 = vadd.f32 %v674, 0.0
        %v677 = vadd.f32 %v675, 0.0
        %v678 = vmul.f32 %v657, %v655
        %v679 = vmul.f32 %v658, %v656
        %v680 = vsel %vm663, %v678, 0.0
        %v681 = vsel %vm663, %v679, 0.0
        %v682 = vadd.f32 %v680, %v681
        %v683 = vrot.slane %v682, 4
        %v684 = vadd.f32 %v682, %v683
        %v685 = vrot.slane %v684, 2
        %v686 = vadd.f32 %v684, %v685
        %v687 = vrot.slane %v686, 1
        %v688 = vadd.f32 %v686, %v687
        %v689 = vmax.f32 %v688, 0.0
        %v690 = vmul.f32 %v659, %v689
        %v691 = vmul.f32 %v660, %v689
        %v692 = vadd.f32 %v690, 0.0
        %v693 = vadd.f32 %v691, 0.0
        %v694 = vadd.f32 %v676, %v692
        %v695 = vadd.f32 %v677, %v693
        %v696 = vxor.u32 %v694, 2147483648
        %v697 = vxor.u32 %v695, 2147483648
        %v698 = vmul.f32 %v696, 1.442695
        %v699 = vpow.pop %v698
        %v700 = vmul.f32 %v697, 1.442695
        %v701 = vpow.pop %v700
        %v702 = vadd.f32 %v699, 1.0
        %v703 = vadd.f32 %v701, 1.0
        %v704 = vrcp.pop %v702
        %v705 = vmul.f32 %v702, %v704
        %v706 = vsub.f32 1.0, %v705
        %v707 = vmul.f32 %v704, %v706
        %v708 = vadd.f32 %v704, %v707
        %vm709 = vweird.f32 %v702
        %vm710 = vweird.f32 %v704
        %vm711 = vmor %vm709, %vm710
        %v712 = vsel %vm711, %v704, %v708
        %v713 = vand.u32 2147483647, %v702
        %vm714 = vcmp.eq.f32.partialorder %v713, 8.507059e+37
        %v715 = vand.u32 %v702, 2147483648
        %v716 = vor.u32 1.1754944e-38, %v715
        %v717 = vsel %vm714, %v716, %v712
        %v718 = vmul.f32 1.0, %v717
        %v719 = vrcp.pop %v703
        %v720 = vmul.f32 %v703, %v719
        %v721 = vsub.f32 1.0, %v720
        %v722 = vmul.f32 %v719, %v721
        %v723 = vadd.f32 %v719, %v722
        %vm724 = vweird.f32 %v703
        %vm725 = vweird.f32 %v719
        %vm726 = vmor %vm724, %vm725
        %v727 = vsel %vm726, %v719, %v723
        %v728 = vand.u32 2147483647, %v703
        %vm729 = vcmp.eq.f32.partialorder %v728, 8.507059e+37
        %v730 = vand.u32 %v703, 2147483648
        %v731 = vor.u32 1.1754944e-38, %v730
        %v732 = vsel %vm729, %v731, %v727
        %v733 = vmul.f32 1.0, %v732
        %735 = vset.pattern.permute.xlu0 0
        %736 = vperm.xlu0 %735, %v718
        %v737 = vpop.permute.xlu0 %736
        %v740 = vunpack.c.l.s4 839922192
        %v741 = vunpack.c.0.s8 %v740
        %v742 = vperm.slane %v737, %v741
        %v744 = vmul.f32 %v541, %v742
        %746 = vst [vmem:[#allocation1] ss:$2 sm:$0xff] %v744
        %v747 = vld.sshfl [vmem:[#allocation1] sm:$0xff pattern:$0x75316420]
        %v748 = vld.sshfl [vmem:[#allocation1 + $0x8] sm:$0xff pattern:$0x75316420]
        %v751 = vsel %vm551, %v747, 0.0
        %v752 = vrot.slane %v751, 4
        %v753 = vadd.f32 %v751, %v752
        %v754 = vrot.slane %v753, 2
        %v755 = vadd.f32 %v753, %v754
        %v756 = vrot.slane %v755, 1
        %v757 = vadd.f32 %v755, %v756
        %v758 = vsel %vm551, %v748, 0.0
        %v759 = vrot.slane %v758, 4
        %v760 = vadd.f32 %v758, %v759
        %v761 = vrot.slane %v760, 2
        %v762 = vadd.f32 %v760, %v761
        %v763 = vrot.slane %v762, 1
        %v764 = vadd.f32 %v762, %v763
        %v765 = vrcp.pop 4.0
        %v766 = vmul.f32 4.0, %v765
        %v767 = vsub.f32 1.0, %v766
        %v768 = vmul.f32 %v765, %v767
        %v769 = vadd.f32 %v765, %v768
        %vm770 = vweird.f32 %v765
        %v771 = vsel %vm770, %v765, %v769
        %v772 = vmul.f32 %v757, %v771
        %v773 = vmul.f32 %v764, %v771
        %774 = vst [vmem:[#allocation1] ss:$2 sm:$0xff] %v744
        %v775 = vld.sshfl [vmem:[#allocation1] sm:$0xff pattern:$0x75316420]
        %v776 = vld.sshfl [vmem:[#allocation1 + $0x8] sm:$0xff pattern:$0x75316420]
        %v779 = vsel %vm551, %v775, -inf
        %v780 = vrot.slane %v779, 4
        %v781 = vmax.f32 %v779, %v780
        %v782 = vrot.slane %v781, 2
        %v783 = vmax.f32 %v781, %v782
        %v784 = vrot.slane %v783, 1
        %v785 = vmax.f32 %v783, %v784
        %v786 = vsel %vm551, %v776, -inf
        %v787 = vrot.slane %v786, 4
        %v788 = vmax.f32 %v786, %v787
        %v789 = vrot.slane %v788, 2
        %v790 = vmax.f32 %v788, %v789
        %v791 = vrot.slane %v790, 1
        %v792 = vmax.f32 %v790, %v791
        %v794 = vunpack.c.l.s4 1985246804
        %v795 = vunpack.c.0.s8 %v794
        %v796 = vperm.slane %v737, %v795
        %v798 = vmul.f32 %v542, %v796
        %800 = vst [vmem:[#allocation1] ss:$2 sm:$0xff] %v798
        %v801 = vld.sshfl [vmem:[#allocation1] sm:$0xff pattern:$0x75316420]
        %v802 = vld.sshfl [vmem:[#allocation1 + $0x8] sm:$0xff pattern:$0x75316420]
        %v805 = vsel %vm551, %v801, 0.0
        %v806 = vrot.slane %v805, 4
        %v807 = vadd.f32 %v805, %v806
        %v808 = vrot.slane %v807, 2
        %v809 = vadd.f32 %v807, %v808
        %v810 = vrot.slane %v809, 1
        %v811 = vadd.f32 %v809, %v810
        %v812 = vsel %vm551, %v802, 0.0
        %v813 = vrot.slane %v812, 4
        %v814 = vadd.f32 %v812, %v813
        %v815 = vrot.slane %v814, 2
        %v816 = vadd.f32 %v814, %v815
        %v817 = vrot.slane %v816, 1
        %v818 = vadd.f32 %v816, %v817
        %v819 = vmul.f32 %v811, %v771
        %v820 = vmul.f32 %v818, %v771
        %821 = vst [vmem:[#allocation1] ss:$2 sm:$0xff] %v798
        %v822 = vld.sshfl [vmem:[#allocation1] sm:$0xff pattern:$0x75316420]
        %v823 = vld.sshfl [vmem:[#allocation1 + $0x8] sm:$0xff pattern:$0x75316420]
        %v826 = vsel %vm551, %v822, -inf
        %v827 = vrot.slane %v826, 4
        %v828 = vmax.f32 %v826, %v827
        %v829 = vrot.slane %v828, 2
        %v830 = vmax.f32 %v828, %v829
        %v831 = vrot.slane %v830, 1
        %v832 = vmax.f32 %v830, %v831
        %v833 = vsel %vm551, %v823, -inf
        %v834 = vrot.slane %v833, 4
        %v835 = vmax.f32 %v833, %v834
        %v836 = vrot.slane %v835, 2
        %v837 = vmax.f32 %v835, %v836
        %v838 = vrot.slane %v837, 1
        %v839 = vmax.f32 %v837, %v838
        %841 = vset.pattern.permute.xlu0 0
        %842 = vperm.xlu0 %841, %v733
        %v843 = vpop.permute.xlu0 %842
        %v846 = vunpack.c.l.s4 839922192
        %v847 = vunpack.c.0.s8 %v846
        %v848 = vperm.slane %v843, %v847
        %v850 = vmul.f32 %v543, %v848
        %852 = vst [vmem:[#allocation1] ss:$2 sm:$0xff] %v850
        %v853 = vld.sshfl [vmem:[#allocation1] sm:$0xff pattern:$0x75316420]
        %v854 = vld.sshfl [vmem:[#allocation1 + $0x8] sm:$0xff pattern:$0x75316420]
        %v857 = vsel %vm551, %v853, 0.0
        %v858 = vrot.slane %v857, 4
        %v859 = vadd.f32 %v857, %v858
        %v860 = vrot.slane %v859, 2
        %v861 = vadd.f32 %v859, %v860
        %v862 = vrot.slane %v861, 1
        %v863 = vadd.f32 %v861, %v862
        %v864 = vsel %vm551, %v854, 0.0
        %v865 = vrot.slane %v864, 4
        %v866 = vadd.f32 %v864, %v865
        %v867 = vrot.slane %v866, 2
        %v868 = vadd.f32 %v866, %v867
        %v869 = vrot.slane %v868, 1
        %v870 = vadd.f32 %v868, %v869
        %v871 = vmul.f32 %v863, %v771
        %v872 = vmul.f32 %v870, %v771
        %873 = vst [vmem:[#allocation1] ss:$2 sm:$0xff] %v850
        %v874 = vld.sshfl [vmem:[#allocation1] sm:$0xff pattern:$0x75316420]
        %v875 = vld.sshfl [vmem:[#allocation1 + $0x8] sm:$0xff pattern:$0x75316420]
        %v878 = vsel %vm551, %v874, -inf
        %v879 = vrot.slane %v878, 4
        %v880 = vmax.f32 %v878, %v879
        %v881 = vrot.slane %v880, 2
        %v882 = vmax.f32 %v880, %v881
        %v883 = vrot.slane %v882, 1
        %v884 = vmax.f32 %v882, %v883
        %v885 = vsel %vm551, %v875, -inf
        %v886 = vrot.slane %v885, 4
        %v887 = vmax.f32 %v885, %v886
        %v888 = vrot.slane %v887, 2
        %v889 = vmax.f32 %v887, %v888
        %v890 = vrot.slane %v889, 1
        %v891 = vmax.f32 %v889, %v890
        %v893 = vunpack.c.l.s4 1985246804
        %v894 = vunpack.c.0.s8 %v893
        %v895 = vperm.slane %v843, %v894
        %v897 = vmul.f32 %v544, %v895
        %899 = vst [vmem:[#allocation1] ss:$2 sm:$0xff] %v897
        %v900 = vld.sshfl [vmem:[#allocation1] sm:$0xff pattern:$0x75316420]
        %v901 = vld.sshfl [vmem:[#allocation1 + $0x8] sm:$0xff pattern:$0x75316420]
        %v904 = vsel %vm551, %v900, 0.0
        %v905 = vrot.slane %v904, 4
        %v906 = vadd.f32 %v904, %v905
        %v907 = vrot.slane %v906, 2
        %v908 = vadd.f32 %v906, %v907
        %v909 = vrot.slane %v908, 1
        %v910 = vadd.f32 %v908, %v909
        %v911 = vsel %vm551, %v901, 0.0
        %v912 = vrot.slane %v911, 4
        %v913 = vadd.f32 %v911, %v912
        %v914 = vrot.slane %v913, 2
        %v915 = vadd.f32 %v913, %v914
        %v916 = vrot.slane %v915, 1
        %v917 = vadd.f32 %v915, %v916
        %v918 = vmul.f32 %v910, %v771
        %v919 = vmul.f32 %v917, %v771
        %920 = vst [vmem:[#allocation1] ss:$2 sm:$0xff] %v897
        %v921 = vld.sshfl [vmem:[#allocation1] sm:$0xff pattern:$0x75316420]
        %v922 = vld.sshfl [vmem:[#allocation1 + $0x8] sm:$0xff pattern:$0x75316420]
        %v925 = vsel %vm551, %v921, -inf
        %v926 = vrot.slane %v925, 4
        %v927 = vmax.f32 %v925, %v926
        %v928 = vrot.slane %v927, 2
        %v929 = vmax.f32 %v927, %v928
        %v930 = vrot.slane %v929, 1
        %v931 = vmax.f32 %v929, %v930
        %v932 = vsel %vm551, %v922, -inf
        %v933 = vrot.slane %v932, 4
        %v934 = vmax.f32 %v932, %v933
        %v935 = vrot.slane %v934, 2
        %v936 = vmax.f32 %v934, %v935
        %v937 = vrot.slane %v936, 1
        %v938 = vmax.f32 %v936, %v937
        %vm939 = vcmask 1040384
        %v940 = vsel %vm939, %v772, %v819
        %v941 = vsel %vm939, %v773, %v820
        %vm942 = vcmask 1041408
        %v943 = vsel %vm942, %v940, %v871
        %v944 = vsel %vm942, %v941, %v872
        %vm945 = vcmask 1042432
        %v946 = vsel %vm945, %v943, %v918
        %v947 = vsel %vm945, %v944, %v919
        %v948 = vsel %vm551, %v946, %v785
        %v949 = vsel %vm551, %v947, %v792
        %vm950 = vcmask 1044480
        %v951 = vsel %vm950, %v948, %v832
        %v952 = vsel %vm950, %v949, %v839
        %vm953 = vcmask 1045504
        %v954 = vsel %vm953, %v951, %v884
        %v955 = vsel %vm953, %v952, %v891
        %vm956 = vcmask 1046528
        %v957 = vsel %vm956, %v954, %v931
        %v958 = vsel %vm956, %v955, %v938
        %vm959 = vcmask 23552
        %v960 = vsel %vm959, 0.0, 1.0
        %962 = vrot.lane.b32.xlu0 %v960, 16
        %v963 = vpop.permute.xlu0 %962
        %965 = vrot.lane.b32.xlu0 %v960, 32
        %v966 = vpop.permute.xlu0 %965
        %968 = vrot.lane.b32.xlu0 %v960, 48
        %v969 = vpop.permute.xlu0 %968
        %971 = vrot.lane.b32.xlu0 %v960, 64
        %v972 = vpop.permute.xlu0 %971
        %974 = vrot.lane.b32.xlu0 %v960, 80
        %v975 = vpop.permute.xlu0 %974
        %977 = vrot.lane.b32.xlu0 %v960, 96
        %v978 = vpop.permute.xlu0 %977
        %980 = vrot.lane.b32.xlu0 %v960, 112
        %v981 = vpop.permute.xlu0 %980
        %vm983 = vcmask 130048
        %v984 = vsel %vm983, %v960, %v963
        %vm985 = vcmask 261120
        %v986 = vsel %vm985, %v984, %v966
        %vm987 = vcmask 392192
        %v988 = vsel %vm987, %v986, %v969
        %vm989 = vcmask 523264
        %v990 = vsel %vm989, %v988, %v972
        %vm991 = vcmask 654336
        %v992 = vsel %vm991, %v990, %v975
        %vm993 = vcmask 785408
        %v994 = vsel %vm993, %v992, %v978
        %vm995 = vcmask 916480
        %v996 = vsel %vm995, %v994, %v981
        %vm997 = vcmask 15360
        %v998 = vsel %vm997, 0.0, 1.0
        %1000 = vrot.lane.b32.xlu0 %v998, 16
        %v1001 = vpop.permute.xlu0 %1000
        %1003 = vrot.lane.b32.xlu0 %v998, 32
        %v1004 = vpop.permute.xlu0 %1003
        %1006 = vrot.lane.b32.xlu0 %v998, 48
        %v1007 = vpop.permute.xlu0 %1006
        %1009 = vrot.lane.b32.xlu0 %v998, 64
        %v1010 = vpop.permute.xlu0 %1009
        %1012 = vrot.lane.b32.xlu0 %v998, 80
        %v1013 = vpop.permute.xlu0 %1012
        %1015 = vrot.lane.b32.xlu0 %v998, 96
        %v1016 = vpop.permute.xlu0 %1015
        %1018 = vrot.lane.b32.xlu0 %v998, 112
        %v1019 = vpop.permute.xlu0 %1018
        %v1021 = vsel %vm983, %v998, %v1001
        %v1022 = vsel %vm985, %v1021, %v1004
        %v1023 = vsel %vm987, %v1022, %v1007
        %v1024 = vsel %vm989, %v1023, %v1010
        %v1025 = vsel %vm991, %v1024, %v1013
        %v1026 = vsel %vm993, %v1025, %v1016
        %v1027 = vsel %vm995, %v1026, %v1019
        %v1028 = vsel %vm663, 0.0, 1.0
        %1030 = vrot.lane.b32.xlu0 %v1028, 16
        %v1031 = vpop.permute.xlu0 %1030
        %1033 = vrot.lane.b32.xlu0 %v1028, 32
        %v1034 = vpop.permute.xlu0 %1033
        %1036 = vrot.lane.b32.xlu0 %v1028, 48
        %v1037 = vpop.permute.xlu0 %1036
        %1039 = vrot.lane.b32.xlu0 %v1028, 64
        %v1040 = vpop.permute.xlu0 %1039
        %1042 = vrot.lane.b32.xlu0 %v1028, 80
        %v1043 = vpop.permute.xlu0 %1042
        %1045 = vrot.lane.b32.xlu0 %v1028, 96
        %v1046 = vpop.permute.xlu0 %1045
        %1048 = vrot.lane.b32.xlu0 %v1028, 112
        %v1049 = vpop.permute.xlu0 %1048
        %v1051 = vsel %vm983, %v1028, %v1031
        %v1052 = vsel %vm985, %v1051, %v1034
        %v1053 = vsel %vm987, %v1052, %v1037
        %v1054 = vsel %vm989, %v1053, %v1040
        %v1055 = vsel %vm991, %v1054, %v1043
        %v1056 = vsel %vm993, %v1055, %v1046
        %v1057 = vsel %vm995, %v1056, %v1049
        %vm1058 = vcmask 121856
        %v1059 = vsel %vm1058, 1.0, 0.0
        %1061 = vrot.lane.b32.xlu0 %v1059, 16
        %v1062 = vpop.permute.xlu0 %1061
        %1064 = vrot.lane.b32.xlu0 %v1059, 32
        %v1065 = vpop.permute.xlu0 %1064
        %1067 = vrot.lane.b32.xlu0 %v1059, 48
        %v1068 = vpop.permute.xlu0 %1067
        %1070 = vrot.lane.b32.xlu0 %v1059, 64
        %v1071 = vpop.permute.xlu0 %1070
        %1073 = vrot.lane.b32.xlu0 %v1059, 80
        %v1074 = vpop.permute.xlu0 %1073
        %1076 = vrot.lane.b32.xlu0 %v1059, 96
        %v1077 = vpop.permute.xlu0 %1076
        %1079 = vrot.lane.b32.xlu0 %v1059, 112
        %v1080 = vpop.permute.xlu0 %1079
        %v1082 = vsel %vm983, %v1059, %v1062
        %v1083 = vsel %vm985, %v1082, %v1065
        %v1084 = vsel %vm987, %v1083, %v1068
        %v1085 = vsel %vm989, %v1084, %v1071
        %v1086 = vsel %vm991, %v1085, %v1074
        %v1087 = vsel %vm993, %v1086, %v1077
        %v1088 = vsel %vm995, %v1087, %v1080
        %vm1089 = vcmask 113664
        %v1090 = vsel %vm1089, 1.0, 0.0
        %1092 = vrot.lane.b32.xlu0 %v1090, 16
        %v1093 = vpop.permute.xlu0 %1092
        %1095 = vrot.lane.b32.xlu0 %v1090, 32
        %v1096 = vpop.permute.xlu0 %1095
        %1098 = vrot.lane.b32.xlu0 %v1090, 48
        %v1099 = vpop.permute.xlu0 %1098
        %1101 = vrot.lane.b32.xlu0 %v1090, 64
        %v1102 = vpop.permute.xlu0 %1101
        %1104 = vrot.lane.b32.xlu0 %v1090, 80
        %v1105 = vpop.permute.xlu0 %1104
        %1107 = vrot.lane.b32.xlu0 %v1090, 96
        %v1108 = vpop.permute.xlu0 %1107
        %1110 = vrot.lane.b32.xlu0 %v1090, 112
        %v1111 = vpop.permute.xlu0 %1110
        %v1113 = vsel %vm983, %v1090, %v1093
        %v1114 = vsel %vm985, %v1113, %v1096
        %v1115 = vsel %vm987, %v1114, %v1099
        %v1116 = vsel %vm989, %v1115, %v1102
        %v1117 = vsel %vm991, %v1116, %v1105
        %v1118 = vsel %vm993, %v1117, %v1108
        %v1119 = vsel %vm995, %v1118, %v1111
        %vm1120 = vcmask 105472
        %v1121 = vsel %vm1120, 1.0, 0.0
        %1123 = vrot.lane.b32.xlu0 %v1121, 16
        %v1124 = vpop.permute.xlu0 %1123
        %1126 = vrot.lane.b32.xlu0 %v1121, 32
        %v1127 = vpop.permute.xlu0 %1126
        %1129 = vrot.lane.b32.xlu0 %v1121, 48
        %v1130 = vpop.permute.xlu0 %1129
        %1132 = vrot.lane.b32.xlu0 %v1121, 64
        %v1133 = vpop.permute.xlu0 %1132
        %1135 = vrot.lane.b32.xlu0 %v1121, 80
        %v1136 = vpop.permute.xlu0 %1135
        %1138 = vrot.lane.b32.xlu0 %v1121, 96
        %v1139 = vpop.permute.xlu0 %1138
        %1141 = vrot.lane.b32.xlu0 %v1121, 112
        %v1142 = vpop.permute.xlu0 %1141
        %v1144 = vsel %vm983, %v1121, %v1124
        %v1145 = vsel %vm985, %v1144, %v1127
        %v1146 = vsel %vm987, %v1145, %v1130
        %v1147 = vsel %vm989, %v1146, %v1133
        %v1148 = vsel %vm991, %v1147, %v1136
        %v1149 = vsel %vm993, %v1148, %v1139
        %v1150 = vsel %vm995, %v1149, %v1142
        %v1151 = vld [vmem:[#allocation8] sm:$0xff]
        %1154 = vrot.lane.b32.xlu0 %v957, 3
        %v1155 = vpop.permute.xlu0 %1154
        %1156 = vrot.lane.b32.xlu0 %v958, 3
        %v1157 = vpop.permute.xlu0 %1156
        %v1158 = vsel %vm959, %v1155, %v1157
        %v1161 = vsel %vm959, 0.0, %v1155
        %v1162 = vperm.slane %v996, 0
        %v1163 = vmul.f32 %v1161, %v1162
        %v1164 = vmul.f32 %v1158, %v1162
        %1166 = vset.pattern.permute.xlu0 0
        %1167 = vperm.xlu0 %1166, %v1151
        %v1168 = vpop.permute.xlu0 %1167
        %v1170 = vmul.f32 %v1163, %v1168
        %v1171 = vmul.f32 %v1164, %v1168
        %1172 = vset.pattern.permute.xlu0 7
        %1173 = vperm.xlu0 %1172, %v1151
        %v1174 = vpop.permute.xlu0 %1173
        %v1176 = vmul.f32 %v1163, %v1174
        %v1177 = vmul.f32 %v1164, %v1174
        %1178 = vset.pattern.permute.xlu0 14
        %1179 = vperm.xlu0 %1178, %v1151
        %v1180 = vpop.permute.xlu0 %1179
        %v1182 = vmul.f32 %v1163, %v1180
        %v1183 = vmul.f32 %v1164, %v1180
        %1184 = vset.pattern.permute.xlu0 21
        %1185 = vperm.xlu0 %1184, %v1151
        %v1186 = vpop.permute.xlu0 %1185
        %v1188 = vmul.f32 %v1163, %v1186
        %v1189 = vmul.f32 %v1164, %v1186
        %1190 = vset.pattern.permute.xlu0 28
        %1191 = vperm.xlu0 %1190, %v1151
        %v1192 = vpop.permute.xlu0 %1191
        %v1194 = vmul.f32 %v1163, %v1192
        %v1195 = vmul.f32 %v1164, %v1192
        %1196 = vset.pattern.permute.xlu0 35
        %1197 = vperm.xlu0 %1196, %v1151
        %v1198 = vpop.permute.xlu0 %1197
        %v1200 = vmul.f32 %v1163, %v1198
        %v1201 = vmul.f32 %v1164, %v1198
        %1202 = vset.pattern.permute.xlu0 42
        %1203 = vperm.xlu0 %1202, %v1151
        %v1204 = vpop.permute.xlu0 %1203
        %v1206 = vmul.f32 %v1163, %v1204
        %v1207 = vmul.f32 %v1164, %v1204
        %1208 = vrot.lane.b32.xlu0 %v957, 2
        %v1209 = vpop.permute.xlu0 %1208
        %1210 = vrot.lane.b32.xlu0 %v958, 2
        %v1211 = vpop.permute.xlu0 %1210
        %v1212 = vsel %vm997, %v1209, %v1211
        %v1215 = vsel %vm997, 0.0, %v1209
        %v1216 = vperm.slane %v1027, 0
        %v1217 = vmul.f32 %v1215, %v1216
        %v1218 = vmul.f32 %v1212, %v1216
        %1219 = vset.pattern.permute.xlu0 1
        %1220 = vperm.xlu0 %1219, %v1151
        %v1221 = vpop.permute.xlu0 %1220
        %v1223 = vmul.f32 %v1217, %v1221
        %v1224 = vmul.f32 %v1218, %v1221
        %v1225 = vadd.f32 %v1170, %v1223
        %v1226 = vadd.f32 %v1171, %v1224
        %1227 = vset.pattern.permute.xlu0 8
        %1228 = vperm.xlu0 %1227, %v1151
        %v1229 = vpop.permute.xlu0 %1228
        %v1231 = vmul.f32 %v1217, %v1229
        %v1232 = vmul.f32 %v1218, %v1229
        %v1233 = vadd.f32 %v1176, %v1231
        %v1234 = vadd.f32 %v1177, %v1232
        %1235 = vset.pattern.permute.xlu0 15
        %1236 = vperm.xlu0 %1235, %v1151
        %v1237 = vpop.permute.xlu0 %1236
        %v1239 = vmul.f32 %v1217, %v1237
        %v1240 = vmul.f32 %v1218, %v1237
        %v1241 = vadd.f32 %v1182, %v1239
        %v1242 = vadd.f32 %v1183, %v1240
        %1243 = vset.pattern.permute.xlu0 22
        %1244 = vperm.xlu0 %1243, %v1151
        %v1245 = vpop.permute.xlu0 %1244
        %v1247 = vmul.f32 %v1217, %v1245
        %v1248 = vmul.f32 %v1218, %v1245
        %v1249 = vadd.f32 %v1188, %v1247
        %v1250 = vadd.f32 %v1189, %v1248
        %1251 = vset.pattern.permute.xlu0 29
        %1252 = vperm.xlu0 %1251, %v1151
        %v1253 = vpop.permute.xlu0 %1252
        %v1255 = vmul.f32 %v1217, %v1253
        %v1256 = vmul.f32 %v1218, %v1253
        %v1257 = vadd.f32 %v1194, %v1255
        %v1258 = vadd.f32 %v1195, %v1256
        %1259 = vset.pattern.permute.xlu0 36
        %1260 = vperm.xlu0 %1259, %v1151
        %v1261 = vpop.permute.xlu0 %1260
        %v1263 = vmul.f32 %v1217, %v1261
        %v1264 = vmul.f32 %v1218, %v1261
        %v1265 = vadd.f32 %v1200, %v1263
        %v1266 = vadd.f32 %v1201, %v1264
        %1267 = vset.pattern.permute.xlu0 43
        %1268 = vperm.xlu0 %1267, %v1151
        %v1269 = vpop.permute.xlu0 %1268
        %v1271 = vmul.f32 %v1217, %v1269
        %v1272 = vmul.f32 %v1218, %v1269
        %v1273 = vadd.f32 %v1206, %v1271
        %v1274 = vadd.f32 %v1207, %v1272
        %1275 = vrot.lane.b32.xlu0 %v957, 1
        %v1276 = vpop.permute.xlu0 %1275
        %1277 = vrot.lane.b32.xlu0 %v958, 1
        %v1278 = vpop.permute.xlu0 %1277
        %v1279 = vsel %vm663, %v1276, %v1278
        %v1282 = vsel %vm663, 0.0, %v1276
        %v1283 = vperm.slane %v1057, 0
        %v1284 = vmul.f32 %v1282, %v1283
        %v1285 = vmul.f32 %v1279, %v1283
        %1286 = vset.pattern.permute.xlu0 2
        %1287 = vperm.xlu0 %1286, %v1151
        %v1288 = vpop.permute.xlu0 %1287
        %v1290 = vmul.f32 %v1284, %v1288
        %v1291 = vmul.f32 %v1285, %v1288
        %v1292 = vadd.f32 %v1225, %v1290
        %v1293 = vadd.f32 %v1226, %v1291
        %1294 = vset.pattern.permute.xlu0 9
        %1295 = vperm.xlu0 %1294, %v1151
        %v1296 = vpop.permute.xlu0 %1295
        %v1298 = vmul.f32 %v1284, %v1296
        %v1299 = vmul.f32 %v1285, %v1296
        %v1300 = vadd.f32 %v1233, %v1298
        %v1301 = vadd.f32 %v1234, %v1299
        %1302 = vset.pattern.permute.xlu0 16
        %1303 = vperm.xlu0 %1302, %v1151
        %v1304 = vpop.permute.xlu0 %1303
        %v1306 = vmul.f32 %v1284, %v1304
        %v1307 = vmul.f32 %v1285, %v1304
        %v1308 = vadd.f32 %v1241, %v1306
        %v1309 = vadd.f32 %v1242, %v1307
        %1310 = vset.pattern.permute.xlu0 23
        %1311 = vperm.xlu0 %1310, %v1151
        %v1312 = vpop.permute.xlu0 %1311
        %v1314 = vmul.f32 %v1284, %v1312
        %v1315 = vmul.f32 %v1285, %v1312
        %v1316 = vadd.f32 %v1249, %v1314
        %v1317 = vadd.f32 %v1250, %v1315
        %1318 = vset.pattern.permute.xlu0 30
        %1319 = vperm.xlu0 %1318, %v1151
        %v1320 = vpop.permute.xlu0 %1319
        %v1322 = vmul.f32 %v1284, %v1320
        %v1323 = vmul.f32 %v1285, %v1320
        %v1324 = vadd.f32 %v1257, %v1322
        %v1325 = vadd.f32 %v1258, %v1323
        %1326 = vset.pattern.permute.xlu0 37
        %1327 = vperm.xlu0 %1326, %v1151
        %v1328 = vpop.permute.xlu0 %1327
        %v1330 = vmul.f32 %v1284, %v1328
        %v1331 = vmul.f32 %v1285, %v1328
        %v1332 = vadd.f32 %v1265, %v1330
        %v1333 = vadd.f32 %v1266, %v1331
        %1334 = vset.pattern.permute.xlu0 44
        %1335 = vperm.xlu0 %1334, %v1151
        %v1336 = vpop.permute.xlu0 %1335
        %v1338 = vmul.f32 %v1284, %v1336
        %v1339 = vmul.f32 %v1285, %v1336
        %v1340 = vadd.f32 %v1273, %v1338
        %v1341 = vadd.f32 %v1274, %v1339
        %1342 = vset.pattern.permute.xlu0 3
        %1343 = vperm.xlu0 %1342, %v1151
        %v1344 = vpop.permute.xlu0 %1343
        %v1346 = vmul.f32 %v957, %v1344
        %v1347 = vmul.f32 %v958, %v1344
        %v1348 = vadd.f32 %v1292, %v1346
        %v1349 = vadd.f32 %v1293, %v1347
        %1350 = vset.pattern.permute.xlu0 10
        %1351 = vperm.xlu0 %1350, %v1151
        %v1352 = vpop.permute.xlu0 %1351
        %v1354 = vmul.f32 %v957, %v1352
        %v1355 = vmul.f32 %v958, %v1352
        %v1356 = vadd.f32 %v1300, %v1354
        %v1357 = vadd.f32 %v1301, %v1355
        %1358 = vset.pattern.permute.xlu0 17
        %1359 = vperm.xlu0 %1358, %v1151
        %v1360 = vpop.permute.xlu0 %1359
        %v1362 = vmul.f32 %v957, %v1360
        %v1363 = vmul.f32 %v958, %v1360
        %v1364 = vadd.f32 %v1308, %v1362
        %v1365 = vadd.f32 %v1309, %v1363
        %1366 = vset.pattern.permute.xlu0 24
        %1367 = vperm.xlu0 %1366, %v1151
        %v1368 = vpop.permute.xlu0 %1367
        %v1370 = vmul.f32 %v957, %v1368
        %v1371 = vmul.f32 %v958, %v1368
        %v1372 = vadd.f32 %v1316, %v1370
        %v1373 = vadd.f32 %v1317, %v1371
        %1374 = vset.pattern.permute.xlu0 31
        %1375 = vperm.xlu0 %1374, %v1151
        %v1376 = vpop.permute.xlu0 %1375
        %v1378 = vmul.f32 %v957, %v1376
        %v1379 = vmul.f32 %v958, %v1376
        %v1380 = vadd.f32 %v1324, %v1378
        %v1381 = vadd.f32 %v1325, %v1379
        %1382 = vset.pattern.permute.xlu0 38
        %1383 = vperm.xlu0 %1382, %v1151
        %v1384 = vpop.permute.xlu0 %1383
        %v1386 = vmul.f32 %v957, %v1384
        %v1387 = vmul.f32 %v958, %v1384
        %v1388 = vadd.f32 %v1332, %v1386
        %v1389 = vadd.f32 %v1333, %v1387
        %1390 = vset.pattern.permute.xlu0 45
        %1391 = vperm.xlu0 %1390, %v1151
        %v1392 = vpop.permute.xlu0 %1391
        %v1394 = vmul.f32 %v957, %v1392
        %v1395 = vmul.f32 %v958, %v1392
        %v1396 = vadd.f32 %v1340, %v1394
        %v1397 = vadd.f32 %v1341, %v1395
        %1398 = vrot.lane.b32.xlu0 %v957, 127
        %v1399 = vpop.permute.xlu0 %1398
        %1400 = vrot.lane.b32.xlu0 %v958, 127
        %v1401 = vpop.permute.xlu0 %1400
        %vm1402 = vcmask 1039360
        %v1403 = vsel %vm1402, %v1399, %v1401
        %v1406 = vsel %vm1402, %v1401, 0.0
        %v1407 = vperm.slane %v1088, 0
        %v1408 = vmul.f32 %v1403, %v1407
        %v1409 = vmul.f32 %v1406, %v1407
        %1410 = vset.pattern.permute.xlu0 4
        %1411 = vperm.xlu0 %1410, %v1151
        %v1412 = vpop.permute.xlu0 %1411
        %v1414 = vmul.f32 %v1408, %v1412
        %v1415 = vmul.f32 %v1409, %v1412
        %v1416 = vadd.f32 %v1348, %v1414
        %v1417 = vadd.f32 %v1349, %v1415
        %1418 = vset.pattern.permute.xlu0 11
        %1419 = vperm.xlu0 %1418, %v1151
        %v1420 = vpop.permute.xlu0 %1419
        %v1422 = vmul.f32 %v1408, %v1420
        %v1423 = vmul.f32 %v1409, %v1420
        %v1424 = vadd.f32 %v1356, %v1422
        %v1425 = vadd.f32 %v1357, %v1423
        %1426 = vset.pattern.permute.xlu0 18
        %1427 = vperm.xlu0 %1426, %v1151
        %v1428 = vpop.permute.xlu0 %1427
        %v1430 = vmul.f32 %v1408, %v1428
        %v1431 = vmul.f32 %v1409, %v1428
        %v1432 = vadd.f32 %v1364, %v1430
        %v1433 = vadd.f32 %v1365, %v1431
        %1434 = vset.pattern.permute.xlu0 25
        %1435 = vperm.xlu0 %1434, %v1151
        %v1436 = vpop.permute.xlu0 %1435
        %v1438 = vmul.f32 %v1408, %v1436
        %v1439 = vmul.f32 %v1409, %v1436
        %v1440 = vadd.f32 %v1372, %v1438
        %v1441 = vadd.f32 %v1373, %v1439
        %1442 = vset.pattern.permute.xlu0 32
        %1443 = vperm.xlu0 %1442, %v1151
        %v1444 = vpop.permute.xlu0 %1443
        %v1446 = vmul.f32 %v1408, %v1444
        %v1447 = vmul.f32 %v1409, %v1444
        %v1448 = vadd.f32 %v1380, %v1446
        %v1449 = vadd.f32 %v1381, %v1447
        %1450 = vset.pattern.permute.xlu0 39
        %1451 = vperm.xlu0 %1450, %v1151
        %v1452 = vpop.permute.xlu0 %1451
        %v1454 = vmul.f32 %v1408, %v1452
        %v1455 = vmul.f32 %v1409, %v1452
        %v1456 = vadd.f32 %v1388, %v1454
        %v1457 = vadd.f32 %v1389, %v1455
        %1458 = vset.pattern.permute.xlu0 46
        %1459 = vperm.xlu0 %1458, %v1151
        %v1460 = vpop.permute.xlu0 %1459
        %v1462 = vmul.f32 %v1408, %v1460
        %v1463 = vmul.f32 %v1409, %v1460
        %v1464 = vadd.f32 %v1396, %v1462
        %v1465 = vadd.f32 %v1397, %v1463
        %1466 = vrot.lane.b32.xlu0 %v957, 126
        %v1467 = vpop.permute.xlu0 %1466
        %1468 = vrot.lane.b32.xlu0 %v958, 126
        %v1469 = vpop.permute.xlu0 %1468
        %vm1470 = vcmask 1031168
        %v1471 = vsel %vm1470, %v1467, %v1469
        %v1474 = vsel %vm1470, %v1469, 0.0
        %v1475 = vperm.slane %v1119, 0
        %v1476 = vmul.f32 %v1471, %v1475
        %v1477 = vmul.f32 %v1474, %v1475
        %1478 = vset.pattern.permute.xlu0 5
        %1479 = vperm.xlu0 %1478, %v1151
        %v1480 = vpop.permute.xlu0 %1479
        %v1482 = vmul.f32 %v1476, %v1480
        %v1483 = vmul.f32 %v1477, %v1480
        %v1484 = vadd.f32 %v1416, %v1482
        %v1485 = vadd.f32 %v1417, %v1483
        %1486 = vset.pattern.permute.xlu0 12
        %1487 = vperm.xlu0 %1486, %v1151
        %v1488 = vpop.permute.xlu0 %1487
        %v1490 = vmul.f32 %v1476, %v1488
        %v1491 = vmul.f32 %v1477, %v1488
        %v1492 = vadd.f32 %v1424, %v1490
        %v1493 = vadd.f32 %v1425, %v1491
        %1494 = vset.pattern.permute.xlu0 19
        %1495 = vperm.xlu0 %1494, %v1151
        %v1496 = vpop.permute.xlu0 %1495
        %v1498 = vmul.f32 %v1476, %v1496
        %v1499 = vmul.f32 %v1477, %v1496
        %v1500 = vadd.f32 %v1432, %v1498
        %v1501 = vadd.f32 %v1433, %v1499
        %1502 = vset.pattern.permute.xlu0 26
        %1503 = vperm.xlu0 %1502, %v1151
        %v1504 = vpop.permute.xlu0 %1503
        %v1506 = vmul.f32 %v1476, %v1504
        %v1507 = vmul.f32 %v1477, %v1504
        %v1508 = vadd.f32 %v1440, %v1506
        %v1509 = vadd.f32 %v1441, %v1507
        %1510 = vset.pattern.permute.xlu0 33
        %1511 = vperm.xlu0 %1510, %v1151
        %v1512 = vpop.permute.xlu0 %1511
        %v1514 = vmul.f32 %v1476, %v1512
        %v1515 = vmul.f32 %v1477, %v1512
        %v1516 = vadd.f32 %v1448, %v1514
        %v1517 = vadd.f32 %v1449, %v1515
        %1518 = vset.pattern.permute.xlu0 40
        %1519 = vperm.xlu0 %1518, %v1151
        %v1520 = vpop.permute.xlu0 %1519
        %v1522 = vmul.f32 %v1476, %v1520
        %v1523 = vmul.f32 %v1477, %v1520
        %v1524 = vadd.f32 %v1456, %v1522
        %v1525 = vadd.f32 %v1457, %v1523
        %1526 = vset.pattern.permute.xlu0 47
        %1527 = vperm.xlu0 %1526, %v1151
        %v1528 = vpop.permute.xlu0 %1527
        %v1530 = vmul.f32 %v1476, %v1528
        %v1531 = vmul.f32 %v1477, %v1528
        %v1532 = vadd.f32 %v1464, %v1530
        %v1533 = vadd.f32 %v1465, %v1531
        %1534 = vrot.lane.b32.xlu0 %v957, 125
        %v1535 = vpop.permute.xlu0 %1534
        %1536 = vrot.lane.b32.xlu0 %v958, 125
        %v1537 = vpop.permute.xlu0 %1536
        %vm1538 = vcmask 1022976
        %v1539 = vsel %vm1538, %v1535, %v1537
        %v1542 = vsel %vm1538, %v1537, 0.0
        %v1543 = vperm.slane %v1150, 0
        %v1544 = vmul.f32 %v1539, %v1543
        %v1545 = vmul.f32 %v1542, %v1543
        %1546 = vset.pattern.permute.xlu0 6
        %1547 = vperm.xlu0 %1546, %v1151
        %v1548 = vpop.permute.xlu0 %1547
        %v1550 = vmul.f32 %v1544, %v1548
        %v1551 = vmul.f32 %v1545, %v1548
        %v1552 = vadd.f32 %v1484, %v1550
        %v1553 = vadd.f32 %v1485, %v1551
        %1554 = vset.pattern.permute.xlu0 13
        %1555 = vperm.xlu0 %1554, %v1151
        %v1556 = vpop.permute.xlu0 %1555
        %v1558 = vmul.f32 %v1544, %v1556
        %v1559 = vmul.f32 %v1545, %v1556
        %v1560 = vadd.f32 %v1492, %v1558
        %v1561 = vadd.f32 %v1493, %v1559
        %1562 = vset.pattern.permute.xlu0 20
        %1563 = vperm.xlu0 %1562, %v1151
        %v1564 = vpop.permute.xlu0 %1563
        %v1566 = vmul.f32 %v1544, %v1564
        %v1567 = vmul.f32 %v1545, %v1564
        %v1568 = vadd.f32 %v1500, %v1566
        %v1569 = vadd.f32 %v1501, %v1567
        %1570 = vset.pattern.permute.xlu0 27
        %1571 = vperm.xlu0 %1570, %v1151
        %v1572 = vpop.permute.xlu0 %1571
        %v1574 = vmul.f32 %v1544, %v1572
        %v1575 = vmul.f32 %v1545, %v1572
        %v1576 = vadd.f32 %v1508, %v1574
        %v1577 = vadd.f32 %v1509, %v1575
        %1578 = vset.pattern.permute.xlu0 34
        %1579 = vperm.xlu0 %1578, %v1151
        %v1580 = vpop.permute.xlu0 %1579
        %v1582 = vmul.f32 %v1544, %v1580
        %v1583 = vmul.f32 %v1545, %v1580
        %v1584 = vadd.f32 %v1516, %v1582
        %v1585 = vadd.f32 %v1517, %v1583
        %1586 = vset.pattern.permute.xlu0 41
        %1587 = vperm.xlu0 %1586, %v1151
        %v1588 = vpop.permute.xlu0 %1587
        %v1590 = vmul.f32 %v1544, %v1588
        %v1591 = vmul.f32 %v1545, %v1588
        %v1592 = vadd.f32 %v1524, %v1590
        %v1593 = vadd.f32 %v1525, %v1591
        %1594 = vset.pattern.permute.xlu0 48
        %1595 = vperm.xlu0 %1594, %v1151
        %v1596 = vpop.permute.xlu0 %1595
        %v1598 = vmul.f32 %v1544, %v1596
        %v1599 = vmul.f32 %v1545, %v1596
        %v1600 = vadd.f32 %v1532, %v1598
        %v1601 = vadd.f32 %v1533, %v1599
        %1604 = vrot.lane.b32.xlu0 %v1552, 48
        %v1605 = vpop.permute.xlu0 %1604
        %1606 = vrot.lane.b32.xlu0 %v1553, 48
        %v1607 = vpop.permute.xlu0 %1606
        %v1608 = vsel %vm987, %v1605, %v1607
        %v1611 = vsel %vm987, 0.0, %v1605
        %1614 = vrot.lane.b32.xlu0 %v1560, 32
        %v1615 = vpop.permute.xlu0 %1614
        %1616 = vrot.lane.b32.xlu0 %v1561, 32
        %v1617 = vpop.permute.xlu0 %1616
        %v1618 = vsel %vm985, %v1615, %v1617
        %v1621 = vsel %vm985, 0.0, %v1615
        %v1622 = vadd.f32 %v1611, %v1621
        %v1623 = vadd.f32 %v1608, %v1618
        %1626 = vrot.lane.b32.xlu0 %v1568, 16
        %v1627 = vpop.permute.xlu0 %1626
        %1628 = vrot.lane.b32.xlu0 %v1569, 16
        %v1629 = vpop.permute.xlu0 %1628
        %v1630 = vsel %vm983, %v1627, %v1629
        %v1633 = vsel %vm983, 0.0, %v1627
        %v1634 = vadd.f32 %v1622, %v1633
        %v1635 = vadd.f32 %v1623, %v1630
        %v1636 = vadd.f32 %v1634, %v1576
        %v1637 = vadd.f32 %v1635, %v1577
        %1640 = vrot.lane.b32.xlu0 %v1584, 112
        %v1641 = vpop.permute.xlu0 %1640
        %1642 = vrot.lane.b32.xlu0 %v1585, 112
        %v1643 = vpop.permute.xlu0 %1642
        %v1644 = vsel %vm995, %v1641, %v1643
        %v1647 = vsel %vm995, %v1643, 0.0
        %v1648 = vadd.f32 %v1636, %v1644
        %v1649 = vadd.f32 %v1637, %v1647
        %1652 = vrot.lane.b32.xlu0 %v1592, 96
        %v1653 = vpop.permute.xlu0 %1652
        %1654 = vrot.lane.b32.xlu0 %v1593, 96
        %v1655 = vpop.permute.xlu0 %1654
        %v1656 = vsel %vm993, %v1653, %v1655
        %v1659 = vsel %vm993, %v1655, 0.0
        %v1660 = vadd.f32 %v1648, %v1656
        %v1661 = vadd.f32 %v1649, %v1659
        %1664 = vrot.lane.b32.xlu0 %v1600, 80
        %v1665 = vpop.permute.xlu0 %1664
        %1666 = vrot.lane.b32.xlu0 %v1601, 80
        %v1667 = vpop.permute.xlu0 %1666
        %v1668 = vsel %vm991, %v1665, %v1667
        %v1671 = vsel %vm991, %v1667, 0.0
        %v1672 = vadd.f32 %v1660, %v1668
        %v1673 = vadd.f32 %v1661, %v1671
        %v1676 = vrot.slane %v1672, 4
        %v1677 = vrot.slane %v1673, 4
        %v1680 = vadd.f32 %v1672, %v1676
        %v1681 = vadd.f32 %v1673, %v1677
        %v1682 = vxor.u32 %v1680, 2147483648
        %v1683 = vxor.u32 %v1681, 2147483648
        %v1684 = vmul.f32 %v1682, 1.442695
        %v1685 = vpow.pop %v1684
        %v1686 = vmul.f32 %v1683, 1.442695
        %v1687 = vpow.pop %v1686
        %v1688 = vadd.f32 %v1685, 1.0
        %v1689 = vadd.f32 %v1687, 1.0
        %v1690 = vrcp.pop %v1688
        %v1691 = vmul.f32 %v1688, %v1690
        %v1692 = vsub.f32 1.0, %v1691
        %v1693 = vmul.f32 %v1690, %v1692
        %v1694 = vadd.f32 %v1690, %v1693
        %vm1695 = vweird.f32 %v1688
        %vm1696 = vweird.f32 %v1690
        %vm1697 = vmor %vm1695, %vm1696
        %v1698 = vsel %vm1697, %v1690, %v1694
        %v1699 = vand.u32 2147483647, %v1688
        %vm1700 = vcmp.eq.f32.partialorder %v1699, 8.507059e+37
        %v1701 = vand.u32 %v1688, 2147483648
        %v1702 = vor.u32 1.1754944e-38, %v1701
        %v1703 = vsel %vm1700, %v1702, %v1698
        %v1704 = vmul.f32 1.0, %v1703
        %v1705 = vrcp.pop %v1689
        %v1706 = vmul.f32 %v1689, %v1705
        %v1707 = vsub.f32 1.0, %v1706
        %v1708 = vmul.f32 %v1705, %v1707
        %v1709 = vadd.f32 %v1705, %v1708
        %vm1710 = vweird.f32 %v1689
        %vm1711 = vweird.f32 %v1705
        %vm1712 = vmor %vm1710, %vm1711
        %v1713 = vsel %vm1712, %v1705, %v1709
        %v1714 = vand.u32 2147483647, %v1689
        %vm1715 = vcmp.eq.f32.partialorder %v1714, 8.507059e+37
        %v1716 = vand.u32 %v1689, 2147483648
        %v1717 = vor.u32 1.1754944e-38, %v1716
        %v1718 = vsel %vm1715, %v1717, %v1713
        %v1719 = vmul.f32 1.0, %v1718
        %v1721 = vrot.slane %v1704, 1
        %v1723 = vsel %vm945, %v1721, 0.0
        %v1725 = vrot.slane %v1719, 7
        %v1727 = vsel %vm939, 0.0, %v1725
        %1728 = vrot.lane.b32.xlu0 %v1704, 112
        %v1729 = vpop.permute.xlu0 %1728
        %1730 = vrot.lane.b32.xlu0 %v1719, 112
        %v1731 = vpop.permute.xlu0 %1730
        %v1732 = vsel %vm995, %v1729, %v1731
        %v1735 = vsel %vm995, %v1731, 0.0
        %1737 = vrot.lane.b32.xlu0 %v1723, 112
        %v1738 = vpop.permute.xlu0 %1737
        %v1740 = vsel %vm995, 0.0, %v1738
        %v1741 = vadd.f32 %v1732, 0.0
        %v1742 = vadd.f32 %v1735, %v1740
        %1743 = vrot.lane.b32.xlu0 %v1704, 16
        %v1744 = vpop.permute.xlu0 %1743
        %1745 = vrot.lane.b32.xlu0 %v1719, 16
        %v1746 = vpop.permute.xlu0 %1745
        %v1747 = vsel %vm983, %v1744, %v1746
        %v1750 = vsel %vm983, 0.0, %v1744
        %1752 = vrot.lane.b32.xlu0 %v1727, 16
        %v1753 = vpop.permute.xlu0 %1752
        %v1755 = vsel %vm983, %v1753, 0.0
        %v1756 = vadd.f32 %v1750, %v1755
        %v1757 = vadd.f32 %v1747, 0.0
        %1760 = vrot.lane.b32.xlu0 %v1756, 1
        %v1761 = vpop.permute.xlu0 %1760
        %1762 = vrot.lane.b32.xlu0 %v1757, 1
        %v1763 = vpop.permute.xlu0 %1762
        %v1764 = vsel %vm663, %v1761, %v1763
        %v1767 = vsel %vm663, 0.0, %v1761
        %s1768 = sld [smem:[#allocation9]]
        %v1769 = vstv %s1768
        %v1770 = vmul.f32 %v1767, %v1769
        %v1771 = vmul.f32 %v1764, %v1769
        %1772 = vrot.lane.b32.xlu0 %v1704, 1
        %v1773 = vpop.permute.xlu0 %1772
        %1774 = vrot.lane.b32.xlu0 %v1719, 1
        %v1775 = vpop.permute.xlu0 %1774
        %v1776 = vsel %vm663, %v1773, %v1775
        %v1779 = vsel %vm663, 0.0, %v1773
        %s1780 = sld [smem:[#allocation9 + $0x3]]
        %v1781 = vstv %s1780
        %v1782 = vmul.f32 %v1779, %v1781
        %v1783 = vmul.f32 %v1776, %v1781
        %v1784 = vadd.f32 %v1770, %v1782
        %v1785 = vadd.f32 %v1771, %v1783
        %1788 = vrot.lane.b32.xlu0 %v1741, 1
        %v1789 = vpop.permute.xlu0 %1788
        %1790 = vrot.lane.b32.xlu0 %v1742, 1
        %v1791 = vpop.permute.xlu0 %1790
        %v1792 = vsel %vm663, %v1789, %v1791
        %v1795 = vsel %vm663, 0.0, %v1789
        %s1796 = sld [smem:[#allocation9 + $0x6]]
        %v1797 = vstv %s1796
        %v1798 = vmul.f32 %v1795, %v1797
        %v1799 = vmul.f32 %v1792, %v1797
        %v1800 = vadd.f32 %v1784, %v1798
        %v1801 = vadd.f32 %v1785, %v1799
        %v1802 = vmul.f32 %v1800, %v1283
        %v1803 = vmul.f32 %v1801, %v1283
        %s1804 = sld [smem:[#allocation9 + $0x1]]
        %v1805 = vstv %s1804
        %v1806 = vmul.f32 %v1756, %v1805
        %v1807 = vmul.f32 %v1757, %v1805
        %s1808 = sld [smem:[#allocation9 + $0x4]]
        %v1809 = vstv %s1808
        %v1810 = vmul.f32 %v1704, %v1809
        %v1811 = vmul.f32 %v1719, %v1809
        %v1812 = vadd.f32 %v1806, %v1810
        %v1813 = vadd.f32 %v1807, %v1811
        %s1814 = sld [smem:[#allocation9 + $0x7]]
        %v1815 = vstv %s1814
        %v1816 = vmul.f32 %v1741, %v1815
        %v1817 = vmul.f32 %v1742, %v1815
        %v1818 = vadd.f32 %v1812, %v1816
        %v1819 = vadd.f32 %v1813, %v1817
        %v1820 = vadd.f32 %v1802, %v1818
        %v1821 = vadd.f32 %v1803, %v1819
        %1822 = vrot.lane.b32.xlu0 %v1756, 127
        %v1823 = vpop.permute.xlu0 %1822
        %1824 = vrot.lane.b32.xlu0 %v1757, 127
        %v1825 = vpop.permute.xlu0 %1824
        %v1826 = vsel %vm1402, %v1823, %v1825
        %v1829 = vsel %vm1402, %v1825, 0.0
        %s1830 = sld [smem:[#allocation9 + $0x2]]
        %v1831 = vstv %s1830
        %v1832 = vmul.f32 %v1826, %v1831
        %v1833 = vmul.f32 %v1829, %v1831
        %1834 = vrot.lane.b32.xlu0 %v1704, 127
        %v1835 = vpop.permute.xlu0 %1834
        %1836 = vrot.lane.b32.xlu0 %v1719, 127
        %v1837 = vpop.permute.xlu0 %1836
        %v1838 = vsel %vm1402, %v1835, %v1837
        %v1841 = vsel %vm1402, %v1837, 0.0
        %s1842 = sld [smem:[#allocation9 + $0x5]]
        %v1843 = vstv %s1842
        %v1844 = vmul.f32 %v1838, %v1843
        %v1845 = vmul.f32 %v1841, %v1843
        %v1846 = vadd.f32 %v1832, %v1844
        %v1847 = vadd.f32 %v1833, %v1845
        %1848 = vrot.lane.b32.xlu0 %v1741, 127
        %v1849 = vpop.permute.xlu0 %1848
        %1850 = vrot.lane.b32.xlu0 %v1742, 127
        %v1851 = vpop.permute.xlu0 %1850
        %v1852 = vsel %vm1402, %v1849, %v1851
        %v1855 = vsel %vm1402, %v1851, 0.0
        %s1856 = sld [smem:[#allocation9 + $0x8]]
        %v1857 = vstv %s1856
        %v1858 = vmul.f32 %v1852, %v1857
        %v1859 = vmul.f32 %v1855, %v1857
        %v1860 = vadd.f32 %v1846, %v1858
        %v1861 = vadd.f32 %v1847, %v1859
        %v1862 = vmul.f32 %v1860, %v1407
        %v1863 = vmul.f32 %v1861, %v1407
        %v1864 = vadd.f32 %v1820, %v1862
        %v1865 = vadd.f32 %v1821, %v1863
        %v1866 = vmul.f32 %v1864, 0.041666668
        %v1867 = vmul.f32 %v1865, 0.041666668
        %v1868 = vadd.f32 %v1866, 0.16666667
        %v1869 = vadd.f32 %v1867, 0.16666667
        %v1870 = vmul.f32 %v1864, %v1868
        %v1871 = vmul.f32 %v1865, %v1869
        %v1872 = vadd.f32 %v1870, 0.5
        %v1873 = vadd.f32 %v1871, 0.5
        %v1874 = vmul.f32 %v1864, %v1872
        %v1875 = vmul.f32 %v1865, %v1873
        %v1876 = vadd.f32 %v1874, 1.0
        %v1877 = vadd.f32 %v1875, 1.0
        %v1878 = vmul.f32 %v1864, %v1876
        %v1879 = vmul.f32 %v1865, %v1877
        %v1880 = vadd.f32 %v1878, 1.0
        %v1881 = vadd.f32 %v1879, 1.0
        %v1882 = vsel %vm551, %v1880, 0.0
        %v1883 = vrot.slane %v1882, 4
        %v1884 = vadd.f32 %v1882, %v1883
        %v1885 = vrot.slane %v1884, 2
        %v1886 = vadd.f32 %v1884, %v1885
        %v1887 = vrot.slane %v1886, 1
        %v1888 = vadd.f32 %v1886, %v1887
        %v1889 = vsel %vm551, %v1881, 0.0
        %v1890 = vrot.slane %v1889, 4
        %v1891 = vadd.f32 %v1889, %v1890
        %v1892 = vrot.slane %v1891, 2
        %v1893 = vadd.f32 %v1891, %v1892
        %v1894 = vrot.slane %v1893, 1
        %v1895 = vadd.f32 %v1893, %v1894
        %v1896 = vadd.f32 %v1888, %v1895
        %1897 = vrot.lane.b32.xlu0 %v1896, 64
        %v1898 = vpop.permute.xlu0 %1897
        %v1899 = vlaneseq
        %v1900 = vand.u32 %v1899, 127
        %v1901 = vadd.f32 %v1896, %v1898
        %1902 = vrot.lane.b32.xlu0 %v1901, 32
        %v1903 = vpop.permute.xlu0 %1902
        %v1904 = vadd.f32 %v1901, %v1903
        %1905 = vrot.lane.b32.xlu0 %v1904, 16
        %v1906 = vpop.permute.xlu0 %1905
        %v1907 = vadd.f32 %v1904, %v1906
        %v1908 = vrcp.pop %v1907
        %v1909 = vmul.f32 %v1907, %v1908
        %v1910 = vsub.f32 1.0, %v1909
        %v1911 = vmul.f32 %v1908, %v1910
        %v1912 = vadd.f32 %v1908, %v1911
        %vm1913 = vweird.f32 %v1907
        %vm1914 = vweird.f32 %v1908
        %vm1915 = vmor %vm1913, %vm1914
        %v1916 = vsel %vm1915, %v1908, %v1912
        %v1917 = vand.u32 2147483647, %v1907
        %vm1918 = vcmp.eq.f32.partialorder %v1917, 8.507059e+37
        %v1919 = vand.u32 %v1907, 2147483648
        %v1920 = vor.u32 1.1754944e-38, %v1919
        %v1921 = vsel %vm1918, %v1920, %v1916
        %v1922 = vperm.slane %v1921, 0
        %v1923 = vmul.f32 %v1880, %v1922
        %v1924 = vmul.f32 %v1881, %v1922
        %v1925 = vperm.slane %v1923, 0
        %v1926 = vperm.slane %v1924, 0
        %v1927 = vmul.f32 %v737, %v1925
        %v1928 = vmul.f32 %v737, %v1926
        %v1931 = vrot.slane %v1928, 4
        %v1932 = vsel %vm551, %v1927, %v1931
        %v1934 = vmul.f32 %v541, %v1932
        %1935 = vst [vmem:[%s509] sm:$0xff] %v1934
        %v1936 = vperm.slane %v1923, 1
        %v1937 = vperm.slane %v1924, 1
        %v1938 = vmul.f32 %v737, %v1936
        %v1939 = vmul.f32 %v737, %v1937
        %1942 = vst.sshfl [vmem:[#allocation1] sm:$0xff pattern:$0x75316420] %v1938
        %1943 = vst.sshfl [vmem:[#allocation1 + $0x8] sm:$0xff pattern:$0x75316420] %v1939
        %s1944 = scalar_lea.vmem [#allocation1], 1
        %v1945 = vld [vmem:[%s1944] ss:$2 sm:$0xff]
        %v1947 = vmul.f32 %v542, %v1945
        %1948 = vst [vmem:[%s516] sm:$0xff] %v1947
        %v1949 = vperm.slane %v1923, 2
        %v1950 = vperm.slane %v1924, 2
        %v1951 = vmul.f32 %v843, %v1949
        %v1952 = vmul.f32 %v843, %v1950
        %v1955 = vrot.slane %v1952, 4
        %v1956 = vsel %vm551, %v1951, %v1955
        %v1958 = vmul.f32 %v543, %v1956
        %1959 = vst [vmem:[%s523] sm:$0xff] %v1958
        %v1960 = vperm.slane %v1923, 3
        %v1961 = vperm.slane %v1924, 3
        %v1962 = vmul.f32 %v843, %v1960
        %v1963 = vmul.f32 %v843, %v1961
        %1966 = vst.sshfl [vmem:[#allocation1] sm:$0xff pattern:$0x75316420] %v1962
        %1967 = vst.sshfl [vmem:[#allocation1 + $0x8] sm:$0xff pattern:$0x75316420] %v1963
        %s1968 = scalar_lea.vmem [#allocation1], 1
        %v1969 = vld [vmem:[%s1968] ss:$2 sm:$0xff]
        %v1971 = vmul.f32 %v544, %v1969
        %1972 = vst [vmem:[%s530] sm:$0xff] %v1971
        %s1973 = sand.u32 %s235, 1
        %s1974 = scalar_lea.sflag [#allocation4], %s1973
        %s1975 = sand.u32 %s235, 1
        %s1976 = smul.addr %s1975, 8
        %s1977 = scalar_lea.vmem [#allocation10], %s1976
        %s1978 = sand.u32 %s39, 1
        %s1979 = scalar_lea.sflag [#allocation12], %s1978
        %s1980 = sand.u32 %s261, 1
        %s1981 = smul.addr %s1980, 8
        %s1982 = scalar_lea.vmem [#allocation11], %s1981
        %s1983 = sand.u32 %s39, 1
        %s1984 = scalar_lea.sflag [#allocation12], %s1983
        %s1985 = sand.u32 %s287, 1
        %s1986 = smul.addr %s1985, 8
        %s1987 = scalar_lea.vmem [#allocation13], %s1986
        %s1988 = sand.u32 %s313, 1
        %s1989 = scalar_lea.sflag [#allocation15], %s1988
        %s1990 = sand.u32 %s313, 1
        %s1991 = smul.addr %s1990, 8
        %s1992 = scalar_lea.vmem [#allocation14], %s1991
        // Predicated region
        $region69: #{tpu_custom_call.1} parent=51 // pred_check
          %p1993 = pneg %p245
        $region70: #{tpu_custom_call.1} parent=51 // pred_check_branch
          %1995 = sbr.rel (%p1993) target = $region72
        $region71: #{tpu_custom_call.1} parent=51 // pred_region
          %1997 = vsyncadd %s1974, 0
          %s1998 = smul.addr %s39, 2
          %s1999 = smul.addr %s1998, 4
          %s2000 = scalar_lea.hbm %s8, %s1999
          %s2002 = sshll.u32 %s1977, 4
          %s2003 = int_to_ptr.vmem [resolvable:$true] %s2002
          %s2004 = sshll.u32 %s2000, 4
          %s2005 = int_to_ptr.hbm [resolvable:$true] %s2004
          %2007 = dma.vmem_to_hbm [thread:$0]  %s2003, 128, %s2005, %s1974
        $region72: #{tpu_custom_call.1} parent=51 // pred_fallthru
          _
        // Predicated region
        $region73: #{tpu_custom_call.1} parent=51 // pred_check
          %p2008 = pneg %p271
        $region74: #{tpu_custom_call.1} parent=51 // pred_check_branch
          %2010 = sbr.rel (%p2008) target = $region76
        $region75: #{tpu_custom_call.1} parent=51 // pred_region
          %2012 = vsyncadd %s1979, 0
          %s2013 = smul.addr %s39, 2
          %s2014 = smul.addr %s2013, 4
          %s2015 = scalar_lea.hbm %s9, %s2014
          %s2017 = sshll.u32 %s1982, 4
          %s2018 = int_to_ptr.vmem [resolvable:$true] %s2017
          %s2019 = sshll.u32 %s2015, 4
          %s2020 = int_to_ptr.hbm [resolvable:$true] %s2019
          %2022 = dma.vmem_to_hbm [thread:$0]  %s2018, 128, %s2020, %s1979
        $region76: #{tpu_custom_call.1} parent=51 // pred_fallthru
          _
        // Predicated region
        $region77: #{tpu_custom_call.1} parent=51 // pred_check
          %p2023 = pneg %p297
        $region78: #{tpu_custom_call.1} parent=51 // pred_check_branch
          %2025 = sbr.rel (%p2023) target = $region80
        $region79: #{tpu_custom_call.1} parent=51 // pred_region
          %2027 = vsyncadd %s1984, 0
          %s2028 = smul.addr %s39, 2
          %s2029 = smul.addr %s2028, 4
          %s2030 = scalar_lea.hbm %s10, %s2029
          %s2032 = sshll.u32 %s1987, 4
          %s2033 = int_to_ptr.vmem [resolvable:$true] %s2032
          %s2034 = sshll.u32 %s2030, 4
          %s2035 = int_to_ptr.hbm [resolvable:$true] %s2034
          %2037 = dma.vmem_to_hbm [thread:$0]  %s2033, 128, %s2035, %s1984
        $region80: #{tpu_custom_call.1} parent=51 // pred_fallthru
          _
        // Predicated region
        $region81: #{tpu_custom_call.1} parent=51 // pred_check
          %p2038 = pneg %p323
        $region82: #{tpu_custom_call.1} parent=51 // pred_check_branch
          %2040 = sbr.rel (%p2038) target = $region84
        $region83: #{tpu_custom_call.1} parent=51 // pred_region
          %2042 = vsyncadd %s1989, 0
          %s2043 = smul.addr %s39, 2
          %s2044 = smul.addr %s2043, 4
          %s2045 = scalar_lea.hbm %s11, %s2044
          %s2047 = sshll.u32 %s1992, 4
          %s2048 = int_to_ptr.vmem [resolvable:$true] %s2047
          %s2049 = sshll.u32 %s2045, 4
          %s2050 = int_to_ptr.hbm [resolvable:$true] %s2049
          %2052 = dma.vmem_to_hbm [thread:$0]  %s2048, 128, %s2050, %s1989
        $region84: #{tpu_custom_call.1} parent=51 // pred_fallthru
          _
      $region52: #{tpu_custom_call.1} parent=5 // pred_fallthru
        _
      %p2053 = scmp.le.s32.totalorder 2, %s34
      // Predicated region
      $region85: #{tpu_custom_call.1} parent=5 // pred_check
        %p2054 = pneg %p2053
      $region86: #{tpu_custom_call.1} parent=5 // pred_check_branch
        %2056 = sbr.rel (%p2054) target = $region88
      $region87: #{tpu_custom_call.1} parent=5 // pred_region
        %s2057 = ssub.s32 %s34, 2
        // Predicated region
        $region89: #{tpu_custom_call.1} parent=87 // pred_check
          %p2058 = pneg %p251
        $region90: #{tpu_custom_call.1} parent=87 // pred_check_branch
          %2060 = sbr.rel (%p2058) target = $region92
        $region91: #{tpu_custom_call.1} parent=87 // pred_region
          %s2061 = sand.u32 %s236, 1
          %s2062 = scalar_lea.sflag [#allocation4], %s2061
          %s2063 = sand.u32 %s236, 1
          %s2064 = smul.addr %s2063, 8
          %s2065 = scalar_lea.vmem [#allocation10], %s2064
          %2067 = dma.done %s2062, 128
        $region92: #{tpu_custom_call.1} parent=87 // pred_fallthru
          _
        // Predicated region
        $region93: #{tpu_custom_call.1} parent=87 // pred_check
          %p2068 = pneg %p277
        $region94: #{tpu_custom_call.1} parent=87 // pred_check_branch
          %2070 = sbr.rel (%p2068) target = $region96
        $region95: #{tpu_custom_call.1} parent=87 // pred_region
          %s2071 = sand.u32 %s40, 1
          %s2072 = scalar_lea.sflag [#allocation12], %s2071
          %s2073 = sand.u32 %s262, 1
          %s2074 = smul.addr %s2073, 8
          %s2075 = scalar_lea.vmem [#allocation11], %s2074
          %2077 = dma.done %s2072, 128
        $region96: #{tpu_custom_call.1} parent=87 // pred_fallthru
          _
        // Predicated region
        $region97: #{tpu_custom_call.1} parent=87 // pred_check
          %p2078 = pneg %p303
        $region98: #{tpu_custom_call.1} parent=87 // pred_check_branch
          %2080 = sbr.rel (%p2078) target = $region100
        $region99: #{tpu_custom_call.1} parent=87 // pred_region
          %s2081 = sand.u32 %s40, 1
          %s2082 = scalar_lea.sflag [#allocation12], %s2081
          %s2083 = sand.u32 %s288, 1
          %s2084 = smul.addr %s2083, 8
          %s2085 = scalar_lea.vmem [#allocation13], %s2084
          %2087 = dma.done %s2082, 128
        $region100: #{tpu_custom_call.1} parent=87 // pred_fallthru
          _
        // Predicated region
        $region101: #{tpu_custom_call.1} parent=87 // pred_check
          %p2088 = pneg %p329
        $region102: #{tpu_custom_call.1} parent=87 // pred_check_branch
          %2090 = sbr.rel (%p2088) target = $region104
        $region103: #{tpu_custom_call.1} parent=87 // pred_region
          %s2091 = sand.u32 %s314, 1
          %s2092 = scalar_lea.sflag [#allocation15], %s2091
          %s2093 = sand.u32 %s314, 1
          %s2094 = smul.addr %s2093, 8
          %s2095 = scalar_lea.vmem [#allocation14], %s2094
          %2097 = dma.done %s2092, 128
        $region104: #{tpu_custom_call.1} parent=87 // pred_fallthru
          _
      $region88: #{tpu_custom_call.1} parent=5 // pred_fallthru
        _
    $region6: #{tpu_custom_call.1} parent=1 // loop_footer
      %s38 = sadd.s32 1, %s34
    $region7: #{tpu_custom_call.1} parent=1 // loop_footer_branch
      %33 = sbr.rel target = $region3
    $region8: #{tpu_custom_call.1} parent=1 // loop_exit
      _
    %2098 = vsyncpa [#allocation3], 1
    %s2099 = scalar_lea.sflag [#allocation3], 1
    %2100 = vsyncpa %s2099, 1
    %2101 = vsyncpa [#allocation7], 1
    %s2102 = scalar_lea.sflag [#allocation7], 1
    %2103 = vsyncpa %s2102, 1
    %2104 = vsyncpa [#allocation4], 1
    %s2105 = scalar_lea.sflag [#allocation4], 1
    %2106 = vsyncpa %s2105, 1
    %2107 = vsyncpa [#allocation12], 1
    %s2108 = scalar_lea.sflag [#allocation12], 1
    %2109 = vsyncpa %s2108, 1
    %2110 = vsyncpa [#allocation15], 1
    %s2111 = scalar_lea.sflag [#allocation15], 1
    %2112 = vsyncpa %s2111, 1
    %2113 = vsyncpa [#allocation5], 1
    %s2114 = scalar_lea.sflag [#allocation5], 1
    %2115 = vsyncpa %s2114, 1

</llo_original>
